<compile_context>
chip_gen: v6e
topology: v6e:2x2x1
jax: 0.10.0
libtpu: 0.0.40
codegen_flags: <defaults>
</compile_context>

<pallas_src>
import jax
import jax.numpy as jnp
from jax.experimental import pallas as pl
from jax.experimental.pallas import tpu as pltpu


def decoder_kernel(xh_ref, eh_ref, enc2_ref,
                   w_rz_ref, w_n_ref, w_attn_ref, w_out_ref,
                   b_all_ref, v_ref, b_out_ref,
                   out_ref):
    """One fused decoder step.

    xh_ref    : (B, 2H)      [embedded_token | h_prev]  (for fused r/z matmuls)
    eh_ref    : (2, B, H)    [embedded_token, h_prev]   (for n gate / h update)
    enc2_ref  : (2, B, T, H) [enc (B,T,H) layout, enc raw (T,B,H) layout] (B==T)
    w_rz_ref  : (2, 2H, H)   fused [Wi_r;Wh_r], [Wi_z;Wh_z]
    w_n_ref   : (2, H, H)    Wi_n, Wh_n
    w_attn_ref: (2, H, H)    attention weight halves (hidden, encoder)
    w_out_ref : (2, H, S)    output weight halves (gru, context), lane-padded
    b_all_ref : (5, 1, H)    b_r(folded), b_z(folded), b_in, b_hn, b_attn
    v_ref     : (H, 1)       attention score vector
    b_out_ref : (1, S)       output bias, lane-padded
    out_ref   : (2, B, S)    [0] = padded logits, [1] = [h_new | attn | 0...]
    """
    B, H2 = xh_ref.shape
    H = H2 // 2
    T = enc2_ref.shape[2]
    S = out_ref.shape[2]

    def dot(a, w):
        return jnp.dot(a, w, preferred_element_type=jnp.float32)

    xh = xh_ref[...]                                    # (B, 2H)
    emb = eh_ref[0]                                     # (B, H)
    h_prev = eh_ref[1]                                  # (B, H)

    # ---- GRU cell, one step (PyTorch gate order r, z, n) ----
    # r/z: single fused (B,2H)x(2H,H) matmul each, bias pre-folded.
    r = jax.nn.sigmoid(dot(xh, w_rz_ref[0]) + b_all_ref[0])
    z = jax.nn.sigmoid(dot(xh, w_rz_ref[1]) + b_all_ref[1])
    # n gate needs gi_n and gh_n separate because of the r * gh_n term.
    gi_n = dot(emb, w_n_ref[0]) + b_all_ref[2]
    gh_n = dot(h_prev, w_n_ref[1]) + b_all_ref[3]
    n = jnp.tanh(gi_n + r * gh_n)
    h_new = (1.0 - z) * n + z * h_prev                  # (B, H)

    # ---- Attention scores on the (B,T,H) layout (no in-kernel transpose) ----
    enc_bt = enc2_ref[0]                                # (B, T, H)
    h_proj = dot(h_new, w_attn_ref[0]) + b_all_ref[4]   # (B, H)  (bias folded)
    e_proj = dot(enc_bt.reshape(B * T, H), w_attn_ref[1]).reshape(B, T, H)
    energy = jnp.tanh(e_proj + h_proj[:, None, :])      # (B, T, H)
    # dot with v on the MXU instead of a lane-axis reduce on the XLU
    scores = dot(energy.reshape(B * T, H), v_ref[...]).reshape(B, T)   # (B, T)

    # softmax over the time axis
    m = jnp.max(scores, axis=1, keepdims=True)
    e = jnp.exp(scores - m)
    attn = e / jnp.sum(e, axis=1, keepdims=True)        # (B, T)

    # ---- Context: faithful "buggy bmm" on the raw (T,B,H) tensor ----
    # context[b, j] = sum_k attn[b, k] * enc_raw[b, k, j]   (requires B == T)
    context = jnp.sum(attn[:, :, None] * enc2_ref[1], axis=1)          # (B, H)

    # ---- Output projection: two half-matmuls, lane-dense padded store ----
    out_ref[0] = dot(h_new, w_out_ref[0]) + dot(context, w_out_ref[1]) + b_out_ref[...]
    # aux slab: lanes [0:H] = h_new, lanes [H:H+T] = attn, rest zero.
    pad = jnp.zeros((B, S - H - T), jnp.float32)
    out_ref[1] = jnp.concatenate([h_new, attn, pad], axis=1)


def decoder_forward(x_ids, hidden, encoder_outputs, p):
    """x_ids: (B,) int32; hidden: (1, B, H) f32; encoder_outputs: (T, B, H) f32."""
    B = x_ids.shape[0]
    T, _, H = encoder_outputs.shape
    O = p["b_out"].shape[0]
    if T != B:
        # Faithful port of `attn_weights.bmm(encoder_outputs)` on the raw
        # (T,B,H) tensor, which only makes sense when batch == timestep.
        raise ValueError("Decoder (PyTorch bmm semantics) requires B == T")

    S = ((max(O, H + T) + 127) // 128) * 128            # lane-dense output slab width
    assert H + T <= S and O <= S

    # ---- wrapper-side prep (plain XLA): gather, transpose, packing, folding ----
    emb_x = p["emb"][x_ids]                             # (B, H) embedding gather
    h0 = hidden[-1]                                     # (B, H)
    xh = jnp.concatenate([emb_x, h0], axis=1)           # (B, 2H) for fused r/z
    eh = jnp.stack([emb_x, h0])                         # (2, B, H)

    enc_bt = jnp.swapaxes(encoder_outputs, 0, 1)        # (B, T, H) for scoring
    enc2 = jnp.stack([enc_bt, encoder_outputs])         # (2, B, T, H)  (B == T)

    w_ih, w_hh = p["w_ih"], p["w_hh"]                   # (3H, H) each, gates r|z|n
    b_ih, b_hh = p["b_ih"], p["b_hh"]
    wi = lambda g: w_ih[g * H:(g + 1) * H].T            # (H, H)
    wh = lambda g: w_hh[g * H:(g + 1) * H].T
    bi = lambda g: b_ih[g * H:(g + 1) * H]
    bh = lambda g: b_hh[g * H:(g + 1) * H]

    # fused r/z weights: xh = [emb | h]  =>  xh @ [Wi; Wh] = emb@Wi + h@Wh
    w_rz = jnp.stack([jnp.concatenate([wi(0), wh(0)], axis=0),
                      jnp.concatenate([wi(1), wh(1)], axis=0)])        # (2, 2H, H)
    w_n = jnp.stack([wi(2), wh(2)])                                    # (2, H, H)

    b_all = jnp.stack([
        (bi(0) + bh(0)).reshape(1, H),                  # folded r bias
        (bi(1) + bh(1)).reshape(1, H),                  # folded z bias
        bi(2).reshape(1, H),                            # b_in
        bh(2).reshape(1, H),                            # b_hn
        p["b_attn"].reshape(1, H),                      # attention bias
    ])                                                  # (5, 1, H)

    w_attn = p["w_attn"]                                # (H, 2H)
    w_attn2 = jnp.stack([w_attn[:, :H].T, w_attn[:, H:].T])            # (2, H, H)
    v = p["v"].reshape(H, 1)

    w_out = p["w_out"]                                  # (O, 2H)
    padw = lambda w: jnp.pad(w, ((0, 0), (0, S - O)))
    w_out2 = jnp.stack([padw(w_out[:, :H].T), padw(w_out[:, H:].T)])   # (2, H, S)
    b_out = jnp.pad(p["b_out"], (0, S - O)).reshape(1, S)

    args = (xh, eh, enc2, w_rz, w_n, w_attn2, w_out2, b_all, v, b_out)
    vmem = pl.BlockSpec(memory_space=pltpu.MemorySpace.VMEM)

    out = pl.pallas_call(
        decoder_kernel,
        out_shape=jax.ShapeDtypeStruct((2, B, S), jnp.float32),
        in_specs=[vmem] * len(args),
        out_specs=vmem,
    )(*args)

    logits = out[0, :, :O]
    h_new = out[1, :, :H]
    attn = out[1, :, H:H + T]
    return logits, h_new[None], attn[:, None, :]


def reference_forward(x_ids, hidden, enc, p):
    """Pure-JAX mirror of the PyTorch Decoder.forward (for verification)."""
    B = x_ids.shape[0]
    T = enc.shape[0]
    H = p["emb"].shape[1]
    emb = p["emb"][x_ids]                                     # (B, H)
    h = hidden[-1]
    gi = emb @ p["w_ih"].T + p["b_ih"]
    gh = h @ p["w_hh"].T + p["b_hh"]
    r = jax.nn.sigmoid(gi[:, :H] + gh[:, :H])
    z = jax.nn.sigmoid(gi[:, H:2 * H] + gh[:, H:2 * H])
    n = jnp.tanh(gi[:, 2 * H:] + r * gh[:, 2 * H:])
    h_new = (1.0 - z) * n + z * h
    enc_bt = jnp.swapaxes(enc, 0, 1)                          # (B, T, H)
    h_rep = jnp.broadcast_to(h_new[:, None, :], (B, T, H))
    cat = jnp.concatenate([h_rep, enc_bt], axis=2)
    energy = jnp.tanh(cat @ p["w_attn"].T + p["b_attn"])      # (B, T, H)
    scores = jnp.einsum("bth,h->bt", energy, p["v"])
    attn = jax.nn.softmax(scores, axis=1)
    context = jnp.einsum("bt,bth->bh", attn, enc)             # buggy bmm semantics
    out = jnp.concatenate([h_new, context], axis=1) @ p["w_out"].T + p["b_out"]
    return out, h_new[None], attn[:, None, :]


if __name__ == "__main__":
    B = 8          # batch
    T = 8          # timesteps (must equal B, see note at top)
    H = 32         # hidden_size (small test size)
    O = 10         # output_size (vocab)

    key = jax.random.PRNGKey(0)
    keys = jax.random.split(key, 16)
    init = lambda k, shape: (jax.random.uniform(k, shape, jnp.float32) - 0.5) * 0.2

    params = {
        "emb":    init(keys[0], (O, H)),
        "w_ih":   init(keys[1], (3 * H, H)),
        "w_hh":   init(keys[2], (3 * H, H)),
        "b_ih":   init(keys[3], (3 * H,)),
        "b_hh":   init(keys[4], (3 * H,)),
        "w_attn": init(keys[5], (H, 2 * H)),
        "b_attn": init(keys[6], (H,)),
        "v":      jax.random.uniform(keys[7], (H,), jnp.float32),
        "w_out":  init(keys[8], (O, 2 * H)),
        "b_out":  init(keys[9], (O,)),
    }

    x_ids = jax.random.randint(keys[10], (B,), 0, O, dtype=jnp.int32)
    hidden0 = jnp.zeros((1, B, H), jnp.float32)               # Decoder.init_hidden
    enc_out = init(keys[11], (T, B, H)) * 10.0                # (timestep, batch, hidden)

    logits, hidden_new, attn_w = decoder_forward(x_ids, hidden0, enc_out, params)
    jax.block_until_ready((logits, hidden_new, attn_w))

    ref_logits, ref_hidden, ref_attn = reference_forward(x_ids, hidden0, enc_out, params)
    assert logits.shape == (B, O) and hidden_new.shape == (1, B, H) and attn_w.shape == (B, 1, T)
    assert jnp.allclose(logits, ref_logits, rtol=2e-3, atol=2e-3)
    assert jnp.allclose(hidden_new, ref_hidden, rtol=2e-3, atol=2e-3)
    assert jnp.allclose(attn_w, ref_attn, rtol=2e-3, atol=2e-3)

    print("KERNEL_OK")
</pallas_src>

<mosaic_0001>
module attributes {stable_mosaic.version = 11 : i64} {
  func.func @decoder_kernel(%arg0: memref<8x64xf32, #tpu.memory_space<vmem>>, %arg1: memref<2x8x32xf32, #tpu.memory_space<vmem>>, %arg2: memref<2x8x8x32xf32, #tpu.memory_space<vmem>>, %arg3: memref<2x64x32xf32, #tpu.memory_space<vmem>>, %arg4: memref<2x32x32xf32, #tpu.memory_space<vmem>>, %arg5: memref<2x32x32xf32, #tpu.memory_space<vmem>>, %arg6: memref<2x32x128xf32, #tpu.memory_space<vmem>>, %arg7: memref<5x1x32xf32, #tpu.memory_space<vmem>>, %arg8: memref<32x1xf32, #tpu.memory_space<vmem>>, %arg9: memref<1x128xf32, #tpu.memory_space<vmem>>, %arg10: memref<2x8x128xf32, #tpu.memory_space<vmem>>) attributes {dimension_semantics = [], scalar_prefetch = 0 : i64, scratch_operands = 0 : i64, tpu.core_type = #tpu.core_type<tc>} {
    %c0 = arith.constant 0 : index
    %c0_0 = arith.constant 0 : index
    %0 = vector.load %arg0[%c0, %c0_0] : memref<8x64xf32, #tpu.memory_space<vmem>>, vector<8x64xf32>
    %c0_1 = arith.constant 0 : index
    %c0_2 = arith.constant 0 : index
    %c0_3 = arith.constant 0 : index
    %1 = vector.load %arg1[%c0_1, %c0_2, %c0_3] : memref<2x8x32xf32, #tpu.memory_space<vmem>>, vector<1x8x32xf32>
    %2 = vector.shape_cast %1 : vector<1x8x32xf32> to vector<8x32xf32>
    %c1 = arith.constant 1 : index
    %c0_4 = arith.constant 0 : index
    %c0_5 = arith.constant 0 : index
    %3 = vector.load %arg1[%c1, %c0_4, %c0_5] : memref<2x8x32xf32, #tpu.memory_space<vmem>>, vector<1x8x32xf32>
    %4 = vector.shape_cast %3 : vector<1x8x32xf32> to vector<8x32xf32>
    %c0_6 = arith.constant 0 : index
    %c0_7 = arith.constant 0 : index
    %c0_8 = arith.constant 0 : index
    %5 = vector.load %arg3[%c0_6, %c0_7, %c0_8] : memref<2x64x32xf32, #tpu.memory_space<vmem>>, vector<1x64x32xf32>
    %6 = vector.shape_cast %5 : vector<1x64x32xf32> to vector<64x32xf32>
    %cst = arith.constant dense<0.000000e+00> : vector<8x32xf32>
    %7 = tpu.matmul %0, %6, %cst {dimension_numbers = #tpu.dot_dimension_numbers<[1], [0], [0], [1], [0, 0, 1, 1], [], []>} : vector<8x64xf32>, vector<64x32xf32>, vector<8x32xf32> -> vector<8x32xf32>
    %c0_9 = arith.constant 0 : index
    %c0_10 = arith.constant 0 : index
    %c0_11 = arith.constant 0 : index
    %8 = vector.load %arg7[%c0_9, %c0_10, %c0_11] : memref<5x1x32xf32, #tpu.memory_space<vmem>>, vector<1x1x32xf32>
    %9 = vector.shape_cast %8 : vector<1x1x32xf32> to vector<1x32xf32>
    %10 = vector.broadcast %9 : vector<1x32xf32> to vector<8x32xf32>
    %11 = arith.addf %7, %10 : vector<8x32xf32>
    %12 = arith.negf %11 : vector<8x32xf32>
    %13 = math.exp %12 : vector<8x32xf32>
    %cst_12 = arith.constant 1.000000e+00 : f32
    %14 = vector.broadcast %cst_12 : f32 to vector<8x32xf32>
    %15 = arith.addf %14, %13 : vector<8x32xf32>
    %16 = arith.divf %14, %15 : vector<8x32xf32>
    %c1_13 = arith.constant 1 : index
    %c0_14 = arith.constant 0 : index
    %c0_15 = arith.constant 0 : index
    %17 = vector.load %arg3[%c1_13, %c0_14, %c0_15] : memref<2x64x32xf32, #tpu.memory_space<vmem>>, vector<1x64x32xf32>
    %18 = vector.shape_cast %17 : vector<1x64x32xf32> to vector<64x32xf32>
    %cst_16 = arith.constant dense<0.000000e+00> : vector<8x32xf32>
    %19 = tpu.matmul %0, %18, %cst_16 {dimension_numbers = #tpu.dot_dimension_numbers<[1], [0], [0], [1], [0, 0, 1, 1], [], []>} : vector<8x64xf32>, vector<64x32xf32>, vector<8x32xf32> -> vector<8x32xf32>
    %c1_17 = arith.constant 1 : index
    %c0_18 = arith.constant 0 : index
    %c0_19 = arith.constant 0 : index
    %20 = vector.load %arg7[%c1_17, %c0_18, %c0_19] : memref<5x1x32xf32, #tpu.memory_space<vmem>>, vector<1x1x32xf32>
    %21 = vector.shape_cast %20 : vector<1x1x32xf32> to vector<1x32xf32>
    %22 = vector.broadcast %21 : vector<1x32xf32> to vector<8x32xf32>
    %23 = arith.addf %19, %22 : vector<8x32xf32>
    %24 = arith.negf %23 : vector<8x32xf32>
    %25 = math.exp %24 : vector<8x32xf32>
    %cst_20 = arith.constant 1.000000e+00 : f32
    %26 = vector.broadcast %cst_20 : f32 to vector<8x32xf32>
    %27 = arith.addf %26, %25 : vector<8x32xf32>
    %28 = arith.divf %26, %27 : vector<8x32xf32>
    %c0_21 = arith.constant 0 : index
    %c0_22 = arith.constant 0 : index
    %c0_23 = arith.constant 0 : index
    %29 = vector.load %arg4[%c0_21, %c0_22, %c0_23] : memref<2x32x32xf32, #tpu.memory_space<vmem>>, vector<1x32x32xf32>
    %30 = vector.shape_cast %29 : vector<1x32x32xf32> to vector<32x32xf32>
    %cst_24 = arith.constant dense<0.000000e+00> : vector<8x32xf32>
    %31 = tpu.matmul %2, %30, %cst_24 {dimension_numbers = #tpu.dot_dimension_numbers<[1], [0], [0], [1], [0, 0, 1, 1], [], []>} : vector<8x32xf32>, vector<32x32xf32>, vector<8x32xf32> -> vector<8x32xf32>
    %c2 = arith.constant 2 : index
    %c0_25 = arith.constant 0 : index
    %c0_26 = arith.constant 0 : index
    %32 = vector.load %arg7[%c2, %c0_25, %c0_26] : memref<5x1x32xf32, #tpu.memory_space<vmem>>, vector<1x1x32xf32>
    %33 = vector.shape_cast %32 : vector<1x1x32xf32> to vector<1x32xf32>
    %34 = vector.broadcast %33 : vector<1x32xf32> to vector<8x32xf32>
    %35 = arith.addf %31, %34 : vector<8x32xf32>
    %c1_27 = arith.constant 1 : index
    %c0_28 = arith.constant 0 : index
    %c0_29 = arith.constant 0 : index
    %36 = vector.load %arg4[%c1_27, %c0_28, %c0_29] : memref<2x32x32xf32, #tpu.memory_space<vmem>>, vector<1x32x32xf32>
    %37 = vector.shape_cast %36 : vector<1x32x32xf32> to vector<32x32xf32>
    %cst_30 = arith.constant dense<0.000000e+00> : vector<8x32xf32>
    %38 = tpu.matmul %4, %37, %cst_30 {dimension_numbers = #tpu.dot_dimension_numbers<[1], [0], [0], [1], [0, 0, 1, 1], [], []>} : vector<8x32xf32>, vector<32x32xf32>, vector<8x32xf32> -> vector<8x32xf32>
    %c3 = arith.constant 3 : index
    %c0_31 = arith.constant 0 : index
    %c0_32 = arith.constant 0 : index
    %39 = vector.load %arg7[%c3, %c0_31, %c0_32] : memref<5x1x32xf32, #tpu.memory_space<vmem>>, vector<1x1x32xf32>
    %40 = vector.shape_cast %39 : vector<1x1x32xf32> to vector<1x32xf32>
    %41 = vector.broadcast %40 : vector<1x32xf32> to vector<8x32xf32>
    %42 = arith.addf %38, %41 : vector<8x32xf32>
    %43 = arith.mulf %16, %42 : vector<8x32xf32>
    %44 = arith.addf %35, %43 : vector<8x32xf32>
    %45 = math.tanh %44 : vector<8x32xf32>
    %cst_33 = arith.constant 1.000000e+00 : f32
    %46 = vector.broadcast %cst_33 : f32 to vector<8x32xf32>
    %47 = arith.subf %46, %28 : vector<8x32xf32>
    %48 = arith.mulf %47, %45 : vector<8x32xf32>
    %49 = arith.mulf %28, %4 : vector<8x32xf32>
    %50 = arith.addf %48, %49 : vector<8x32xf32>
    %c0_34 = arith.constant 0 : index
    %c0_35 = arith.constant 0 : index
    %c0_36 = arith.constant 0 : index
    %c0_37 = arith.constant 0 : index
    %51 = vector.load %arg2[%c0_34, %c0_35, %c0_36, %c0_37] : memref<2x8x8x32xf32, #tpu.memory_space<vmem>>, vector<1x8x8x32xf32>
    %52 = vector.shape_cast %51 : vector<1x8x8x32xf32> to vector<8x8x32xf32>
    %c0_38 = arith.constant 0 : index
    %c0_39 = arith.constant 0 : index
    %c0_40 = arith.constant 0 : index
    %53 = vector.load %arg5[%c0_38, %c0_39, %c0_40] : memref<2x32x32xf32, #tpu.memory_space<vmem>>, vector<1x32x32xf32>
    %54 = vector.shape_cast %53 : vector<1x32x32xf32> to vector<32x32xf32>
    %cst_41 = arith.constant dense<0.000000e+00> : vector<8x32xf32>
    %55 = tpu.matmul %50, %54, %cst_41 {dimension_numbers = #tpu.dot_dimension_numbers<[1], [0], [0], [1], [0, 0, 1, 1], [], []>} : vector<8x32xf32>, vector<32x32xf32>, vector<8x32xf32> -> vector<8x32xf32>
    %c4 = arith.constant 4 : index
    %c0_42 = arith.constant 0 : index
    %c0_43 = arith.constant 0 : index
    %56 = vector.load %arg7[%c4, %c0_42, %c0_43] : memref<5x1x32xf32, #tpu.memory_space<vmem>>, vector<1x1x32xf32>
    %57 = vector.shape_cast %56 : vector<1x1x32xf32> to vector<1x32xf32>
    %58 = vector.broadcast %57 : vector<1x32xf32> to vector<8x32xf32>
    %59 = arith.addf %55, %58 : vector<8x32xf32>
    %60 = vector.shape_cast %52 : vector<8x8x32xf32> to vector<64x32xf32>
    %c1_44 = arith.constant 1 : index
    %c0_45 = arith.constant 0 : index
    %c0_46 = arith.constant 0 : index
    %61 = vector.load %arg5[%c1_44, %c0_45, %c0_46] : memref<2x32x32xf32, #tpu.memory_space<vmem>>, vector<1x32x32xf32>
    %62 = vector.shape_cast %61 : vector<1x32x32xf32> to vector<32x32xf32>
    %cst_47 = arith.constant dense<0.000000e+00> : vector<64x32xf32>
    %63 = tpu.matmul %60, %62, %cst_47 {dimension_numbers = #tpu.dot_dimension_numbers<[1], [0], [0], [1], [0, 0, 1, 1], [], []>} : vector<64x32xf32>, vector<32x32xf32>, vector<64x32xf32> -> vector<64x32xf32>
    %64 = vector.shape_cast %63 : vector<64x32xf32> to vector<8x8x32xf32>
    %65 = vector.shape_cast %59 : vector<8x32xf32> to vector<8x1x32xf32>
    %66 = vector.broadcast %65 : vector<8x1x32xf32> to vector<8x8x32xf32>
    %67 = arith.addf %64, %66 : vector<8x8x32xf32>
    %68 = math.tanh %67 : vector<8x8x32xf32>
    %69 = vector.shape_cast %68 : vector<8x8x32xf32> to vector<64x32xf32>
    %c0_48 = arith.constant 0 : index
    %c0_49 = arith.constant 0 : index
    %70 = vector.load %arg8[%c0_48, %c0_49] : memref<32x1xf32, #tpu.memory_space<vmem>>, vector<32x1xf32>
    %cst_50 = arith.constant dense<0.000000e+00> : vector<64x1xf32>
    %71 = tpu.matmul %69, %70, %cst_50 {dimension_numbers = #tpu.dot_dimension_numbers<[1], [0], [0], [1], [0, 0, 1, 1], [], []>} : vector<64x32xf32>, vector<32x1xf32>, vector<64x1xf32> -> vector<64x1xf32>
    %72 = vector.shape_cast %71 : vector<64x1xf32> to vector<8x8xf32>
    %cst_51 = arith.constant dense<0xFF800000> : vector<8xf32>
    %73 = vector.multi_reduction <maximumf>, %72, %cst_51 [1] : vector<8x8xf32> to vector<8xf32>
    %74 = vector.shape_cast %73 : vector<8xf32> to vector<8x1xf32>
    %75 = vector.broadcast %74 : vector<8x1xf32> to vector<8x8xf32>
    %76 = arith.subf %72, %75 : vector<8x8xf32>
    %77 = math.exp %76 : vector<8x8xf32>
    %cst_52 = arith.constant dense<0.000000e+00> : vector<8xf32>
    %78 = vector.multi_reduction <add>, %77, %cst_52 [1] : vector<8x8xf32> to vector<8xf32>
    %79 = vector.shape_cast %78 : vector<8xf32> to vector<8x1xf32>
    %80 = vector.broadcast %79 : vector<8x1xf32> to vector<8x8xf32>
    %81 = arith.divf %77, %80 : vector<8x8xf32>
    %82 = vector.shape_cast %81 : vector<8x8xf32> to vector<8x8x1xf32>
    %c1_53 = arith.constant 1 : index
    %c0_54 = arith.constant 0 : index
    %c0_55 = arith.constant 0 : index
    %c0_56 = arith.constant 0 : index
    %83 = vector.load %arg2[%c1_53, %c0_54, %c0_55, %c0_56] : memref<2x8x8x32xf32, #tpu.memory_space<vmem>>, vector<1x8x8x32xf32>
    %84 = vector.shape_cast %83 : vector<1x8x8x32xf32> to vector<8x8x32xf32>
    %85 = vector.broadcast %82 : vector<8x8x1xf32> to vector<8x8x32xf32>
    %86 = arith.mulf %85, %84 : vector<8x8x32xf32>
    %cst_57 = arith.constant dense<0.000000e+00> : vector<8x32xf32>
    %87 = vector.multi_reduction <add>, %86, %cst_57 [1] : vector<8x8x32xf32> to vector<8x32xf32>
    %c0_58 = arith.constant 0 : index
    %c0_59 = arith.constant 0 : index
    %c0_60 = arith.constant 0 : index
    %88 = vector.load %arg6[%c0_58, %c0_59, %c0_60] : memref<2x32x128xf32, #tpu.memory_space<vmem>>, vector<1x32x128xf32>
    %89 = vector.shape_cast %88 : vector<1x32x128xf32> to vector<32x128xf32>
    %cst_61 = arith.constant dense<0.000000e+00> : vector<8x128xf32>
    %90 = tpu.matmul %50, %89, %cst_61 {dimension_numbers = #tpu.dot_dimension_numbers<[1], [0], [0], [1], [0, 0, 1, 1], [], []>} : vector<8x32xf32>, vector<32x128xf32>, vector<8x128xf32> -> vector<8x128xf32>
    %c1_62 = arith.constant 1 : index
    %c0_63 = arith.constant 0 : index
    %c0_64 = arith.constant 0 : index
    %91 = vector.load %arg6[%c1_62, %c0_63, %c0_64] : memref<2x32x128xf32, #tpu.memory_space<vmem>>, vector<1x32x128xf32>
    %92 = vector.shape_cast %91 : vector<1x32x128xf32> to vector<32x128xf32>
    %cst_65 = arith.constant dense<0.000000e+00> : vector<8x128xf32>
    %93 = tpu.matmul %87, %92, %cst_65 {dimension_numbers = #tpu.dot_dimension_numbers<[1], [0], [0], [1], [0, 0, 1, 1], [], []>} : vector<8x32xf32>, vector<32x128xf32>, vector<8x128xf32> -> vector<8x128xf32>
    %94 = arith.addf %90, %93 : vector<8x128xf32>
    %c0_66 = arith.constant 0 : index
    %c0_67 = arith.constant 0 : index
    %95 = vector.load %arg9[%c0_66, %c0_67] : memref<1x128xf32, #tpu.memory_space<vmem>>, vector<1x128xf32>
    %96 = vector.broadcast %95 : vector<1x128xf32> to vector<8x128xf32>
    %97 = arith.addf %94, %96 : vector<8x128xf32>
    %c0_68 = arith.constant 0 : index
    %c0_69 = arith.constant 0 : index
    %c0_70 = arith.constant 0 : index
    %98 = vector.load %arg10[%c0_68, %c0_69, %c0_70] : memref<2x8x128xf32, #tpu.memory_space<vmem>>, vector<1x8x128xf32>
    %99 = vector.shape_cast %98 : vector<1x8x128xf32> to vector<8x128xf32>
    %100 = vector.shape_cast %97 : vector<8x128xf32> to vector<1x8x128xf32>
    tpu.vector_store %arg10[%c0_68, %c0_69, %c0_70], %100 {strides = array<i32>} : memref<2x8x128xf32, #tpu.memory_space<vmem>>, vector<1x8x128xf32>,
    %cst_71 = arith.constant 0.000000e+00 : f32
    %101 = vector.broadcast %cst_71 : f32 to vector<8x88xf32>
    %102 = tpu.concatenate %50, %81, %101 in 1 : vector<8x32xf32>, vector<8x8xf32>, vector<8x88xf32> -> vector<8x128xf32>
    %c1_72 = arith.constant 1 : index
    %c0_73 = arith.constant 0 : index
    %c0_74 = arith.constant 0 : index
    %103 = vector.load %arg10[%c1_72, %c0_73, %c0_74] : memref<2x8x128xf32, #tpu.memory_space<vmem>>, vector<1x8x128xf32>
    %104 = vector.shape_cast %103 : vector<1x8x128xf32> to vector<8x128xf32>
    %105 = vector.shape_cast %102 : vector<8x128xf32> to vector<1x8x128xf32>
    tpu.vector_store %arg10[%c1_72, %c0_73, %c0_74], %105 {strides = array<i32>} : memref<2x8x128xf32, #tpu.memory_space<vmem>>, vector<1x8x128xf32>,
    return
  }
}

</mosaic_0001>

<llo_original>
// kernel: tpu_custom_call.1
$region0: #{tpu_custom_call.1}
  #allocation0 [shape = 'u32[]', space=smem, size = 0x4, offset = 0x4, fixed_abs, tag = 'smem constant byte address 0x4 - core index']
  #allocation1 [shape = 'u32[144,128]{1,0:T(1,128)}', space=vmem, size = 0x12000, scoped, tag = 'internal scratch']
  %s0 = inlined_call_operand.vmem [shape: f32[8,64], index: 0, kind: input, shape index: {}]
  %s1 = inlined_call_operand.vmem [shape: f32[2,8,32], index: 1, kind: input, shape index: {}]
  %s2 = inlined_call_operand.vmem [shape: f32[2,8,8,32], index: 2, kind: input, shape index: {}]
  %s3 = inlined_call_operand.vmem [shape: f32[2,64,32], index: 3, kind: input, shape index: {}]
  %s4 = inlined_call_operand.vmem [shape: f32[2,32,32], index: 4, kind: input, shape index: {}]
  %s5 = inlined_call_operand.hbm [shape: f32[2,32,32], index: 5, kind: input, shape index: {}]
  %s6 = inlined_call_operand.hbm [shape: f32[2,32,128], index: 6, kind: input, shape index: {}]
  %s7 = inlined_call_operand.vmem [shape: f32[5,1,32], index: 7, kind: input, shape index: {}]
  %s8 = inlined_call_operand.vmem [shape: f32[32,1], index: 8, kind: input, shape index: {}]
  %s9 = inlined_call_operand.vmem [shape: f32[1,128], index: 9, kind: input, shape index: {}]
  %s10 = inlined_call_operand.hbm [shape: f32[2,8,128], index: 10, kind: output, shape index: {}]
  %s11 = sld [smem:[#allocation0]]
  $region58: #{tpu_custom_call.1} parent=0
    _
  %s13 = ssub.s32 1, %s11
  %s14 = scalar_select 0, %s13, %s11
  $region1: #{tpu_custom_call.1} parent=0
    #allocation2 [shape = 'u8[32768]{0}', space=vmem, size = 0x8000, scoped, tag = 'input window, operand 5, single buffered']
    #allocation3 [shape = 's32[1]{0}', space=sflag, size = 0x4, scoped, tag = 'scoped memory for tpu_custom_call.1']
    #allocation4 [shape = 's32[1]{0}', space=sflag, size = 0x4, scoped, tag = 'scoped memory for tpu_custom_call.1']
    #allocation5 [shape = 'u8[32768]{0}', space=vmem, size = 0x8000, scoped, tag = 'input window, operand 6, single buffered']
    #allocation6 [shape = 's32[1]{0}', space=sflag, size = 0x4, scoped, tag = 'scoped memory for tpu_custom_call.1']
    #allocation7 [shape = 'u8[8192]{0}', space=vmem, size = 0x2000, scoped, tag = 'output window, operand 0, single buffered']
    %15 = vsyncpa [#allocation3], 0
    %16 = vsyncpa [#allocation6], 0
    %17 = vsyncpa [#allocation4], 0
    // Predicated region
    $region2: #{tpu_custom_call.1} parent=1 // pred_check
      _
    $region3: #{tpu_custom_call.1} parent=1 // pred_check_branch
      %19 = sbr.rel (0) target = $region5
    $region4: #{tpu_custom_call.1} parent=1 // pred_region
      _
    $region5: #{tpu_custom_call.1} parent=1 // pred_fallthru
      _
    // Predicated region
    $region6: #{tpu_custom_call.1} parent=1 // pred_check
      _
    $region7: #{tpu_custom_call.1} parent=1 // pred_check_branch
      %21 = sbr.rel (0) target = $region9
    $region8: #{tpu_custom_call.1} parent=1 // pred_region
      _
    $region9: #{tpu_custom_call.1} parent=1 // pred_fallthru
      _
    // Predicated region
    $region10: #{tpu_custom_call.1} parent=1 // pred_check
      _
    $region11: #{tpu_custom_call.1} parent=1 // pred_check_branch
      %23 = sbr.rel (0) target = $region13
    $region12: #{tpu_custom_call.1} parent=1 // pred_region
      _
    $region13: #{tpu_custom_call.1} parent=1 // pred_fallthru
      _
    // Predicated region
    $region14: #{tpu_custom_call.1} parent=1 // pred_check
      _
    $region15: #{tpu_custom_call.1} parent=1 // pred_check_branch
      %25 = sbr.rel (0) target = $region17
    $region16: #{tpu_custom_call.1} parent=1 // pred_region
      _
    $region17: #{tpu_custom_call.1} parent=1 // pred_fallthru
      _
    // Predicated region
    $region18: #{tpu_custom_call.1} parent=1 // pred_check
      _
    $region19: #{tpu_custom_call.1} parent=1 // pred_check_branch
      %27 = sbr.rel (0) target = $region21
    $region20: #{tpu_custom_call.1} parent=1 // pred_region
      _
    $region21: #{tpu_custom_call.1} parent=1 // pred_fallthru
      _
    // Predicated region
    $region22: #{tpu_custom_call.1} parent=1 // pred_check
      _
    $region23: #{tpu_custom_call.1} parent=1 // pred_check_branch
      %29 = sbr.rel (0) target = $region25
    $region24: #{tpu_custom_call.1} parent=1 // pred_region
      %s31 = ssub.s32 1024, 1024
      %32 = vsyncadd [#allocation3], %s31
      %s33 = sshll.u32 [#allocation2], 4
      %s34 = int_to_ptr.vmem [resolvable:$true] %s33
      %39 = dma.hbm_to_vmem [thread:$0]  %s5, 1024, %s34, [#allocation3], 128, 128, 8
    $region25: #{tpu_custom_call.1} parent=1 // pred_fallthru
      _
    // Predicated region
    $region26: #{tpu_custom_call.1} parent=1 // pred_check
      _
    $region27: #{tpu_custom_call.1} parent=1 // pred_check_branch
      %41 = sbr.rel (0) target = $region29
    $region28: #{tpu_custom_call.1} parent=1 // pred_region
      %s43 = ssub.s32 1024, 1024
      %44 = vsyncadd [#allocation6], %s43
      %s45 = sshll.u32 [#allocation5], 4
      %s46 = int_to_ptr.vmem [resolvable:$true] %s45
      %51 = dma.hbm_to_vmem [thread:$0]  %s6, 1024, %s46, [#allocation6], 128, 128, 8
    $region29: #{tpu_custom_call.1} parent=1 // pred_fallthru
      _
    // Predicated region
    $region30: #{tpu_custom_call.1} parent=1 // pred_check
      _
    $region31: #{tpu_custom_call.1} parent=1 // pred_check_branch
      %53 = sbr.rel (0) target = $region33
    $region32: #{tpu_custom_call.1} parent=1 // pred_region
      _
    $region33: #{tpu_custom_call.1} parent=1 // pred_fallthru
      _
    // Predicated region
    $region34: #{tpu_custom_call.1} parent=1 // pred_check
      _
    $region35: #{tpu_custom_call.1} parent=1 // pred_check_branch
      %55 = sbr.rel (0) target = $region37
    $region36: #{tpu_custom_call.1} parent=1 // pred_region
      _
    $region37: #{tpu_custom_call.1} parent=1 // pred_fallthru
      _
    // Predicated region
    $region38: #{tpu_custom_call.1} parent=1 // pred_check
      _
    $region39: #{tpu_custom_call.1} parent=1 // pred_check_branch
      %57 = sbr.rel (0) target = $region41
    $region40: #{tpu_custom_call.1} parent=1 // pred_region
      _
    $region41: #{tpu_custom_call.1} parent=1 // pred_fallthru
      _
    // Predicated region
    $region42: #{tpu_custom_call.1} parent=1 // pred_check
      _
    $region43: #{tpu_custom_call.1} parent=1 // pred_check_branch
      %59 = sbr.rel (0) target = $region45
    $region44: #{tpu_custom_call.1} parent=1 // pred_region
      %60 = dma.done [#allocation3], 1024
    $region45: #{tpu_custom_call.1} parent=1 // pred_fallthru
      _
    // Predicated region
    $region46: #{tpu_custom_call.1} parent=1 // pred_check
      _
    $region47: #{tpu_custom_call.1} parent=1 // pred_check_branch
      %62 = sbr.rel (0) target = $region49
    $region48: #{tpu_custom_call.1} parent=1 // pred_region
      %63 = dma.done [#allocation6], 1024
    $region49: #{tpu_custom_call.1} parent=1 // pred_fallthru
      _
    %v64 = vld [vmem:[%s0] sm:$0xff]
    %v65 = vld [vmem:[%s1] sm:$0xff]
    %s66 = scalar_lea.vmem %s1, 8
    %v67 = vld [vmem:[%s66] sm:$0xff]
    %v68 = vld [vmem:[%s3] sm:$0xff]
    %v69 = vld [vmem:[%s3 + $0x8] sm:$0xff]
    %v70 = vld [vmem:[%s3 + $0x10] sm:$0xff]
    %v71 = vld [vmem:[%s3 + $0x18] sm:$0xff]
    %v72 = vld [vmem:[%s3 + $0x20] sm:$0xff]
    %v73 = vld [vmem:[%s3 + $0x28] sm:$0xff]
    %v74 = vld [vmem:[%s3 + $0x30] sm:$0xff]
    %v75 = vld [vmem:[%s3 + $0x38] sm:$0xff]
    %v76 = vld [vmem:[%s7] sm:$0x1]
    %v78 = vlaneseq
    %v79 = vshrl.u32 %v78, 7
    %v80 = vsub.s32 0, %v79
    %v81 = vrot.slane %v76, %v80
    %vm83 = vcmask 523264
    %v85 = vsel %vm83, %v64, 0
    %87 = vmatprep.subr.mxu0 0.0
    %88 = vmatpush1.msra.mxu0 0.0
    %89 = vmatprep.subr.mxu0 0.0
    %90 = vmatpush1.msra.mxu0 0.0
    %91 = vmatprep.subr.mxu0 0.0
    %92 = vmatpush1.msra.mxu0 0.0
    %93 = vmatprep.subr.mxu0 0.0
    %94 = vmatpush1.msra.mxu0 0.0
    %95 = vmatprep.subr.mxu0 0.0
    %96 = vmatpush1.msra.mxu0 0.0
    %97 = vmatprep.subr.mxu0 0.0
    %98 = vmatpush1.msra.mxu0 0.0
    %99 = vmatprep.subr.mxu0 0.0
    %100 = vmatpush1.msra.mxu0 0.0
    %101 = vmatprep.subr.mxu0 0.0
    %102 = vmatpush1.msra.mxu0 0.0
    %103 = vmatprep.subr.mxu0 0.0
    %104 = vmatpush1.msra.mxu0 %v75
    %105 = vmatprep.subr.mxu0 0.0
    %106 = vmatpush1.msra.mxu0 %v74
    %107 = vmatprep.subr.mxu0 0.0
    %108 = vmatpush1.msra.mxu0 %v73
    %109 = vmatprep.subr.mxu0 0.0
    %110 = vmatpush1.msra.mxu0 %v72
    %111 = vmatprep.subr.mxu0 0.0
    %112 = vmatpush1.msra.mxu0 %v71
    %113 = vmatprep.subr.mxu0 0.0
    %114 = vmatpush1.msra.mxu0 %v70
    %115 = vmatprep.subr.mxu0 0.0
    %116 = vmatpush1.msra.mxu0 %v69
    %117 = vmatprep.subr.mxu0 0.0
    %118 = vmatpush1.msra.mxu0 %v68
    %119 = vmatprep.subr.mxu0 0.0
    %120 = vmatpush2.msra.mxu0 0.0
    %121 = vmatprep.subr.mxu0 0.0
    %122 = vmatpush2.msra.mxu0 0.0
    %123 = vmatprep.subr.mxu0 0.0
    %124 = vmatpush2.msra.mxu0 0.0
    %125 = vmatprep.subr.mxu0 0.0
    %126 = vmatpush2.msra.mxu0 0.0
    %127 = vmatprep.subr.mxu0 0.0
    %128 = vmatpush2.msra.mxu0 0.0
    %129 = vmatprep.subr.mxu0 0.0
    %130 = vmatpush2.msra.mxu0 0.0
    %131 = vmatprep.subr.mxu0 0.0
    %132 = vmatpush2.msra.mxu0 0.0
    %133 = vmatprep.subr.mxu0 0.0
    %134 = vmatpush2.msra.mxu0 0.0
    %135 = vmatprep.subr.mxu0 0.0
    %136 = vmatpush2.msra.mxu0 0.0
    %137 = vmatprep.subr.mxu0 0.0
    %138 = vmatpush2.msra.mxu0 0.0
    %139 = vmatprep.subr.mxu0 0.0
    %140 = vmatpush2.msra.mxu0 0.0
    %141 = vmatprep.subr.mxu0 0.0
    %142 = vmatpush2.msra.mxu0 0.0
    %143 = vmatprep.subr.mxu0 0.0
    %144 = vmatpush2.msra.mxu0 0.0
    %145 = vmatprep.subr.mxu0 0.0
    %146 = vmatpush2.msra.mxu0 0.0
    %147 = vmatprep.subr.mxu0 0.0
    %148 = vmatpush2.msra.mxu0 0.0
    %149 = vmatprep.subr.mxu0 0.0
    %150 = vmatpush2.msra.mxu0 0.0
    %151 = vmatprep.mubr.f32.mxu0 0.0
    %152 = vmatmul.mubr.f32.gmra.mxu0 %v85
    %v153 = vpop.f32.mrf.mxu0
    %v154 = vadd.f32 %v81, %v153
    %v155 = vpop.f32.mrf.mxu0
    %156 = vdwg.mxu0
    %v157 = vxor.u32 %v154, 2147483648
    %v158 = vmul.f32 %v157, 1.442695
    %v159 = vpow.pop %v158
    %v160 = vadd.f32 %v159, 1.0
    %v161 = vrcp.pop %v160
    %v162 = vmul.f32 1.0, %v161
    %s163 = scalar_lea.vmem %s3, 64
    %v164 = vld [vmem:[%s163] sm:$0xff]
    %v165 = vld [vmem:[%s163 + $0x8] sm:$0xff]
    %v166 = vld [vmem:[%s163 + $0x10] sm:$0xff]
    %v167 = vld [vmem:[%s163 + $0x18] sm:$0xff]
    %v168 = vld [vmem:[%s163 + $0x20] sm:$0xff]
    %v169 = vld [vmem:[%s163 + $0x28] sm:$0xff]
    %v170 = vld [vmem:[%s163 + $0x30] sm:$0xff]
    %v171 = vld [vmem:[%s163 + $0x38] sm:$0xff]
    %s172 = scalar_lea.vmem %s7, 1
    %v173 = vld [vmem:[%s172] sm:$0x1]
    %v175 = vlaneseq
    %v176 = vshrl.u32 %v175, 7
    %v177 = vsub.s32 0, %v176
    %v178 = vrot.slane %v173, %v177
    %180 = vmatprep.subr.mxu0 0.0
    %181 = vmatpush1.msra.mxu0 0.0
    %182 = vmatprep.subr.mxu0 0.0
    %183 = vmatpush1.msra.mxu0 0.0
    %184 = vmatprep.subr.mxu0 0.0
    %185 = vmatpush1.msra.mxu0 0.0
    %186 = vmatprep.subr.mxu0 0.0
    %187 = vmatpush1.msra.mxu0 0.0
    %188 = vmatprep.subr.mxu0 0.0
    %189 = vmatpush1.msra.mxu0 0.0
    %190 = vmatprep.subr.mxu0 0.0
    %191 = vmatpush1.msra.mxu0 0.0
    %192 = vmatprep.subr.mxu0 0.0
    %193 = vmatpush1.msra.mxu0 0.0
    %194 = vmatprep.subr.mxu0 0.0
    %195 = vmatpush1.msra.mxu0 0.0
    %196 = vmatprep.subr.mxu0 0.0
    %197 = vmatpush1.msra.mxu0 %v171
    %198 = vmatprep.subr.mxu0 0.0
    %199 = vmatpush1.msra.mxu0 %v170
    %200 = vmatprep.subr.mxu0 0.0
    %201 = vmatpush1.msra.mxu0 %v169
    %202 = vmatprep.subr.mxu0 0.0
    %203 = vmatpush1.msra.mxu0 %v168
    %204 = vmatprep.subr.mxu0 0.0
    %205 = vmatpush1.msra.mxu0 %v167
    %206 = vmatprep.subr.mxu0 0.0
    %207 = vmatpush1.msra.mxu0 %v166
    %208 = vmatprep.subr.mxu0 0.0
    %209 = vmatpush1.msra.mxu0 %v165
    %210 = vmatprep.subr.mxu0 0.0
    %211 = vmatpush1.msra.mxu0 %v164
    %212 = vmatprep.subr.mxu0 0.0
    %213 = vmatpush2.msra.mxu0 0.0
    %214 = vmatprep.subr.mxu0 0.0
    %215 = vmatpush2.msra.mxu0 0.0
    %216 = vmatprep.subr.mxu0 0.0
    %217 = vmatpush2.msra.mxu0 0.0
    %218 = vmatprep.subr.mxu0 0.0
    %219 = vmatpush2.msra.mxu0 0.0
    %220 = vmatprep.subr.mxu0 0.0
    %221 = vmatpush2.msra.mxu0 0.0
    %222 = vmatprep.subr.mxu0 0.0
    %223 = vmatpush2.msra.mxu0 0.0
    %224 = vmatprep.subr.mxu0 0.0
    %225 = vmatpush2.msra.mxu0 0.0
    %226 = vmatprep.subr.mxu0 0.0
    %227 = vmatpush2.msra.mxu0 0.0
    %228 = vmatprep.subr.mxu0 0.0
    %229 = vmatpush2.msra.mxu0 0.0
    %230 = vmatprep.subr.mxu0 0.0
    %231 = vmatpush2.msra.mxu0 0.0
    %232 = vmatprep.subr.mxu0 0.0
    %233 = vmatpush2.msra.mxu0 0.0
    %234 = vmatprep.subr.mxu0 0.0
    %235 = vmatpush2.msra.mxu0 0.0
    %236 = vmatprep.subr.mxu0 0.0
    %237 = vmatpush2.msra.mxu0 0.0
    %238 = vmatprep.subr.mxu0 0.0
    %239 = vmatpush2.msra.mxu0 0.0
    %240 = vmatprep.subr.mxu0 0.0
    %241 = vmatpush2.msra.mxu0 0.0
    %242 = vmatprep.subr.mxu0 0.0
    %243 = vmatpush2.msra.mxu0 0.0
    %244 = vmatprep.mubr.f32.mxu0 0.0
    %245 = vmatmul.mubr.f32.gmra.mxu0 %v85
    %v246 = vpop.f32.mrf.mxu0
    %v247 = vadd.f32 %v178, %v246
    %v248 = vpop.f32.mrf.mxu0
    %249 = vdwg.mxu0
    %v250 = vxor.u32 %v247, 2147483648
    %v251 = vmul.f32 %v250, 1.442695
    %v252 = vpow.pop %v251
    %v253 = vadd.f32 %v252, 1.0
    %v254 = vrcp.pop %v253
    %v255 = vmul.f32 1.0, %v254
    %v256 = vld [vmem:[%s4] sm:$0xff]
    %v257 = vld [vmem:[%s4 + $0x8] sm:$0xff]
    %v258 = vld [vmem:[%s4 + $0x10] sm:$0xff]
    %v259 = vld [vmem:[%s4 + $0x18] sm:$0xff]
    %s260 = scalar_lea.vmem %s7, 2
    %v261 = vld [vmem:[%s260] sm:$0x1]
    %v263 = vlaneseq
    %v264 = vshrl.u32 %v263, 7
    %v265 = vsub.s32 0, %v264
    %v266 = vrot.slane %v261, %v265
    %vm268 = vcmask 261120
    %v270 = vsel %vm268, %v65, 0
    %272 = vmatprep.subr.mxu0 0.0
    %273 = vmatpush1.msra.mxu0 0.0
    %274 = vmatprep.subr.mxu0 0.0
    %275 = vmatpush1.msra.mxu0 0.0
    %276 = vmatprep.subr.mxu0 0.0
    %277 = vmatpush1.msra.mxu0 0.0
    %278 = vmatprep.subr.mxu0 0.0
    %279 = vmatpush1.msra.mxu0 0.0
    %280 = vmatprep.subr.mxu0 0.0
    %281 = vmatpush1.msra.mxu0 0.0
    %282 = vmatprep.subr.mxu0 0.0
    %283 = vmatpush1.msra.mxu0 0.0
    %284 = vmatprep.subr.mxu0 0.0
    %285 = vmatpush1.msra.mxu0 0.0
    %286 = vmatprep.subr.mxu0 0.0
    %287 = vmatpush1.msra.mxu0 0.0
    %288 = vmatprep.subr.mxu0 0.0
    %289 = vmatpush1.msra.mxu0 0.0
    %290 = vmatprep.subr.mxu0 0.0
    %291 = vmatpush1.msra.mxu0 0.0
    %292 = vmatprep.subr.mxu0 0.0
    %293 = vmatpush1.msra.mxu0 0.0
    %294 = vmatprep.subr.mxu0 0.0
    %295 = vmatpush1.msra.mxu0 0.0
    %296 = vmatprep.subr.mxu0 0.0
    %297 = vmatpush1.msra.mxu0 %v259
    %298 = vmatprep.subr.mxu0 0.0
    %299 = vmatpush1.msra.mxu0 %v258
    %300 = vmatprep.subr.mxu0 0.0
    %301 = vmatpush1.msra.mxu0 %v257
    %302 = vmatprep.subr.mxu0 0.0
    %303 = vmatpush1.msra.mxu0 %v256
    %304 = vmatprep.subr.mxu0 0.0
    %305 = vmatpush2.msra.mxu0 0.0
    %306 = vmatprep.subr.mxu0 0.0
    %307 = vmatpush2.msra.mxu0 0.0
    %308 = vmatprep.subr.mxu0 0.0
    %309 = vmatpush2.msra.mxu0 0.0
    %310 = vmatprep.subr.mxu0 0.0
    %311 = vmatpush2.msra.mxu0 0.0
    %312 = vmatprep.subr.mxu0 0.0
    %313 = vmatpush2.msra.mxu0 0.0
    %314 = vmatprep.subr.mxu0 0.0
    %315 = vmatpush2.msra.mxu0 0.0
    %316 = vmatprep.subr.mxu0 0.0
    %317 = vmatpush2.msra.mxu0 0.0
    %318 = vmatprep.subr.mxu0 0.0
    %319 = vmatpush2.msra.mxu0 0.0
    %320 = vmatprep.subr.mxu0 0.0
    %321 = vmatpush2.msra.mxu0 0.0
    %322 = vmatprep.subr.mxu0 0.0
    %323 = vmatpush2.msra.mxu0 0.0
    %324 = vmatprep.subr.mxu0 0.0
    %325 = vmatpush2.msra.mxu0 0.0
    %326 = vmatprep.subr.mxu0 0.0
    %327 = vmatpush2.msra.mxu0 0.0
    %328 = vmatprep.subr.mxu0 0.0
    %329 = vmatpush2.msra.mxu0 0.0
    %330 = vmatprep.subr.mxu0 0.0
    %331 = vmatpush2.msra.mxu0 0.0
    %332 = vmatprep.subr.mxu0 0.0
    %333 = vmatpush2.msra.mxu0 0.0
    %334 = vmatprep.subr.mxu0 0.0
    %335 = vmatpush2.msra.mxu0 0.0
    %336 = vmatprep.mubr.f32.mxu0 0.0
    %337 = vmatmul.mubr.f32.gmra.mxu0 %v270
    %v338 = vpop.f32.mrf.mxu0
    %v339 = vadd.f32 %v266, %v338
    %v340 = vpop.f32.mrf.mxu0
    %341 = vdwg.mxu0
    %s342 = scalar_lea.vmem %s4, 32
    %v343 = vld [vmem:[%s342] sm:$0xff]
    %v344 = vld [vmem:[%s342 + $0x8] sm:$0xff]
    %v345 = vld [vmem:[%s342 + $0x10] sm:$0xff]
    %v346 = vld [vmem:[%s342 + $0x18] sm:$0xff]
    %s347 = scalar_lea.vmem %s7, 3
    %v348 = vld [vmem:[%s347] sm:$0x1]
    %v350 = vlaneseq
    %v351 = vshrl.u32 %v350, 7
    %v352 = vsub.s32 0, %v351
    %v353 = vrot.slane %v348, %v352
    %v356 = vsel %vm268, %v67, 0
    %358 = vmatprep.subr.mxu0 0.0
    %359 = vmatpush1.msra.mxu0 0.0
    %360 = vmatprep.subr.mxu0 0.0
    %361 = vmatpush1.msra.mxu0 0.0
    %362 = vmatprep.subr.mxu0 0.0
    %363 = vmatpush1.msra.mxu0 0.0
    %364 = vmatprep.subr.mxu0 0.0
    %365 = vmatpush1.msra.mxu0 0.0
    %366 = vmatprep.subr.mxu0 0.0
    %367 = vmatpush1.msra.mxu0 0.0
    %368 = vmatprep.subr.mxu0 0.0
    %369 = vmatpush1.msra.mxu0 0.0
    %370 = vmatprep.subr.mxu0 0.0
    %371 = vmatpush1.msra.mxu0 0.0
    %372 = vmatprep.subr.mxu0 0.0
    %373 = vmatpush1.msra.mxu0 0.0
    %374 = vmatprep.subr.mxu0 0.0
    %375 = vmatpush1.msra.mxu0 0.0
    %376 = vmatprep.subr.mxu0 0.0
    %377 = vmatpush1.msra.mxu0 0.0
    %378 = vmatprep.subr.mxu0 0.0
    %379 = vmatpush1.msra.mxu0 0.0
    %380 = vmatprep.subr.mxu0 0.0
    %381 = vmatpush1.msra.mxu0 0.0
    %382 = vmatprep.subr.mxu0 0.0
    %383 = vmatpush1.msra.mxu0 %v346
    %384 = vmatprep.subr.mxu0 0.0
    %385 = vmatpush1.msra.mxu0 %v345
    %386 = vmatprep.subr.mxu0 0.0
    %387 = vmatpush1.msra.mxu0 %v344
    %388 = vmatprep.subr.mxu0 0.0
    %389 = vmatpush1.msra.mxu0 %v343
    %390 = vmatprep.subr.mxu0 0.0
    %391 = vmatpush2.msra.mxu0 0.0
    %392 = vmatprep.subr.mxu0 0.0
    %393 = vmatpush2.msra.mxu0 0.0
    %394 = vmatprep.subr.mxu0 0.0
    %395 = vmatpush2.msra.mxu0 0.0
    %396 = vmatprep.subr.mxu0 0.0
    %397 = vmatpush2.msra.mxu0 0.0
    %398 = vmatprep.subr.mxu0 0.0
    %399 = vmatpush2.msra.mxu0 0.0
    %400 = vmatprep.subr.mxu0 0.0
    %401 = vmatpush2.msra.mxu0 0.0
    %402 = vmatprep.subr.mxu0 0.0
    %403 = vmatpush2.msra.mxu0 0.0
    %404 = vmatprep.subr.mxu0 0.0
    %405 = vmatpush2.msra.mxu0 0.0
    %406 = vmatprep.subr.mxu0 0.0
    %407 = vmatpush2.msra.mxu0 0.0
    %408 = vmatprep.subr.mxu0 0.0
    %409 = vmatpush2.msra.mxu0 0.0
    %410 = vmatprep.subr.mxu0 0.0
    %411 = vmatpush2.msra.mxu0 0.0
    %412 = vmatprep.subr.mxu0 0.0
    %413 = vmatpush2.msra.mxu0 0.0
    %414 = vmatprep.subr.mxu0 0.0
    %415 = vmatpush2.msra.mxu0 0.0
    %416 = vmatprep.subr.mxu0 0.0
    %417 = vmatpush2.msra.mxu0 0.0
    %418 = vmatprep.subr.mxu0 0.0
    %419 = vmatpush2.msra.mxu0 0.0
    %420 = vmatprep.subr.mxu0 0.0
    %421 = vmatpush2.msra.mxu0 0.0
    %422 = vmatprep.mubr.f32.mxu0 0.0
    %423 = vmatmul.mubr.f32.gmra.mxu0 %v356
    %v424 = vpop.f32.mrf.mxu0
    %v425 = vadd.f32 %v353, %v424
    %v426 = vpop.f32.mrf.mxu0
    %427 = vdwg.mxu0
    %v428 = vmul.f32 %v162, %v425
    %v429 = vadd.f32 %v339, %v428
    %v430 = vtanh.pop %v429
    %v431 = vsub.f32 1.0, %v255
    %v432 = vmul.f32 %v431, %v430
    %v433 = vmul.f32 %v255, %v67
    %v434 = vadd.f32 %v432, %v433
    %v435 = vld [vmem:[%s2] sm:$0xff]
    %v436 = vld [vmem:[%s2 + $0x8] sm:$0xff]
    %v437 = vld [vmem:[%s2 + $0x10] sm:$0xff]
    %v438 = vld [vmem:[%s2 + $0x18] sm:$0xff]
    %v439 = vld [vmem:[%s2 + $0x20] sm:$0xff]
    %v440 = vld [vmem:[%s2 + $0x28] sm:$0xff]
    %v441 = vld [vmem:[%s2 + $0x30] sm:$0xff]
    %v442 = vld [vmem:[%s2 + $0x38] sm:$0xff]
    %v443 = vld [vmem:[#allocation2] sm:$0xff]
    %v444 = vld [vmem:[#allocation2 + $0x8] sm:$0xff]
    %v445 = vld [vmem:[#allocation2 + $0x10] sm:$0xff]
    %v446 = vld [vmem:[#allocation2 + $0x18] sm:$0xff]
    %s447 = scalar_lea.vmem %s7, 4
    %v448 = vld [vmem:[%s447] sm:$0x1]
    %v450 = vlaneseq
    %v451 = vshrl.u32 %v450, 7
    %v452 = vsub.s32 0, %v451
    %v453 = vrot.slane %v448, %v452
    %v456 = vsel %vm268, %v434, 0
    %458 = vmatprep.subr.mxu0 0.0
    %459 = vmatpush1.msra.mxu0 0.0
    %460 = vmatprep.subr.mxu0 0.0
    %461 = vmatpush1.msra.mxu0 0.0
    %462 = vmatprep.subr.mxu0 0.0
    %463 = vmatpush1.msra.mxu0 0.0
    %464 = vmatprep.subr.mxu0 0.0
    %465 = vmatpush1.msra.mxu0 0.0
    %466 = vmatprep.subr.mxu0 0.0
    %467 = vmatpush1.msra.mxu0 0.0
    %468 = vmatprep.subr.mxu0 0.0
    %469 = vmatpush1.msra.mxu0 0.0
    %470 = vmatprep.subr.mxu0 0.0
    %471 = vmatpush1.msra.mxu0 0.0
    %472 = vmatprep.subr.mxu0 0.0
    %473 = vmatpush1.msra.mxu0 0.0
    %474 = vmatprep.subr.mxu0 0.0
    %475 = vmatpush1.msra.mxu0 0.0
    %476 = vmatprep.subr.mxu0 0.0
    %477 = vmatpush1.msra.mxu0 0.0
    %478 = vmatprep.subr.mxu0 0.0
    %479 = vmatpush1.msra.mxu0 0.0
    %480 = vmatprep.subr.mxu0 0.0
    %481 = vmatpush1.msra.mxu0 0.0
    %482 = vmatprep.subr.mxu0 0.0
    %483 = vmatpush1.msra.mxu0 %v446
    %484 = vmatprep.subr.mxu0 0.0
    %485 = vmatpush1.msra.mxu0 %v445
    %486 = vmatprep.subr.mxu0 0.0
    %487 = vmatpush1.msra.mxu0 %v444
    %488 = vmatprep.subr.mxu0 0.0
    %489 = vmatpush1.msra.mxu0 %v443
    %490 = vmatprep.subr.mxu0 0.0
    %491 = vmatpush2.msra.mxu0 0.0
    %492 = vmatprep.subr.mxu0 0.0
    %493 = vmatpush2.msra.mxu0 0.0
    %494 = vmatprep.subr.mxu0 0.0
    %495 = vmatpush2.msra.mxu0 0.0
    %496 = vmatprep.subr.mxu0 0.0
    %497 = vmatpush2.msra.mxu0 0.0
    %498 = vmatprep.subr.mxu0 0.0
    %499 = vmatpush2.msra.mxu0 0.0
    %500 = vmatprep.subr.mxu0 0.0
    %501 = vmatpush2.msra.mxu0 0.0
    %502 = vmatprep.subr.mxu0 0.0
    %503 = vmatpush2.msra.mxu0 0.0
    %504 = vmatprep.subr.mxu0 0.0
    %505 = vmatpush2.msra.mxu0 0.0
    %506 = vmatprep.subr.mxu0 0.0
    %507 = vmatpush2.msra.mxu0 0.0
    %508 = vmatprep.subr.mxu0 0.0
    %509 = vmatpush2.msra.mxu0 0.0
    %510 = vmatprep.subr.mxu0 0.0
    %511 = vmatpush2.msra.mxu0 0.0
    %512 = vmatprep.subr.mxu0 0.0
    %513 = vmatpush2.msra.mxu0 0.0
    %514 = vmatprep.subr.mxu0 0.0
    %515 = vmatpush2.msra.mxu0 0.0
    %516 = vmatprep.subr.mxu0 0.0
    %517 = vmatpush2.msra.mxu0 0.0
    %518 = vmatprep.subr.mxu0 0.0
    %519 = vmatpush2.msra.mxu0 0.0
    %520 = vmatprep.subr.mxu0 0.0
    %521 = vmatpush2.msra.mxu0 0.0
    %522 = vmatprep.mubr.f32.mxu0 0.0
    %523 = vmatmul.mubr.f32.gmra.mxu0 %v456
    %v524 = vpop.f32.mrf.mxu0
    %v525 = vadd.f32 %v453, %v524
    %v526 = vpop.f32.mrf.mxu0
    %527 = vdwg.mxu0
    %s528 = scalar_lea.vmem [#allocation2], 32
    %v529 = vld [vmem:[%s528] sm:$0xff]
    %v530 = vld [vmem:[%s528 + $0x8] sm:$0xff]
    %v531 = vld [vmem:[%s528 + $0x10] sm:$0xff]
    %v532 = vld [vmem:[%s528 + $0x18] sm:$0xff]
    %v534 = vsel %vm268, %v435, 0
    %v537 = vsel %vm268, %v436, 0
    %v540 = vsel %vm268, %v437, 0
    %v543 = vsel %vm268, %v438, 0
    %v546 = vsel %vm268, %v439, 0
    %v549 = vsel %vm268, %v440, 0
    %v552 = vsel %vm268, %v441, 0
    %v555 = vsel %vm268, %v442, 0
    %557 = vmatprep.subr.mxu0 0.0
    %558 = vmatpush1.msra.mxu0 0.0
    %559 = vmatprep.subr.mxu0 0.0
    %560 = vmatpush1.msra.mxu0 0.0
    %561 = vmatprep.subr.mxu0 0.0
    %562 = vmatpush1.msra.mxu0 0.0
    %563 = vmatprep.subr.mxu0 0.0
    %564 = vmatpush1.msra.mxu0 0.0
    %565 = vmatprep.subr.mxu0 0.0
    %566 = vmatpush1.msra.mxu0 0.0
    %567 = vmatprep.subr.mxu0 0.0
    %568 = vmatpush1.msra.mxu0 0.0
    %569 = vmatprep.subr.mxu0 0.0
    %570 = vmatpush1.msra.mxu0 0.0
    %571 = vmatprep.subr.mxu0 0.0
    %572 = vmatpush1.msra.mxu0 0.0
    %573 = vmatprep.subr.mxu0 0.0
    %574 = vmatpush1.msra.mxu0 0.0
    %575 = vmatprep.subr.mxu0 0.0
    %576 = vmatpush1.msra.mxu0 0.0
    %577 = vmatprep.subr.mxu0 0.0
    %578 = vmatpush1.msra.mxu0 0.0
    %579 = vmatprep.subr.mxu0 0.0
    %580 = vmatpush1.msra.mxu0 0.0
    %581 = vmatprep.subr.mxu0 0.0
    %582 = vmatpush1.msra.mxu0 %v532
    %583 = vmatprep.subr.mxu0 0.0
    %584 = vmatpush1.msra.mxu0 %v531
    %585 = vmatprep.subr.mxu0 0.0
    %586 = vmatpush1.msra.mxu0 %v530
    %587 = vmatprep.subr.mxu0 0.0
    %588 = vmatpush1.msra.mxu0 %v529
    %589 = vmatprep.subr.mxu0 0.0
    %590 = vmatpush2.msra.mxu0 0.0
    %591 = vmatprep.subr.mxu0 0.0
    %592 = vmatpush2.msra.mxu0 0.0
    %593 = vmatprep.subr.mxu0 0.0
    %594 = vmatpush2.msra.mxu0 0.0
    %595 = vmatprep.subr.mxu0 0.0
    %596 = vmatpush2.msra.mxu0 0.0
    %597 = vmatprep.subr.mxu0 0.0
    %598 = vmatpush2.msra.mxu0 0.0
    %599 = vmatprep.subr.mxu0 0.0
    %600 = vmatpush2.msra.mxu0 0.0
    %601 = vmatprep.subr.mxu0 0.0
    %602 = vmatpush2.msra.mxu0 0.0
    %603 = vmatprep.subr.mxu0 0.0
    %604 = vmatpush2.msra.mxu0 0.0
    %605 = vmatprep.subr.mxu0 0.0
    %606 = vmatpush2.msra.mxu0 0.0
    %607 = vmatprep.subr.mxu0 0.0
    %608 = vmatpush2.msra.mxu0 0.0
    %609 = vmatprep.subr.mxu0 0.0
    %610 = vmatpush2.msra.mxu0 0.0
    %611 = vmatprep.subr.mxu0 0.0
    %612 = vmatpush2.msra.mxu0 0.0
    %613 = vmatprep.subr.mxu0 0.0
    %614 = vmatpush2.msra.mxu0 0.0
    %615 = vmatprep.subr.mxu0 0.0
    %616 = vmatpush2.msra.mxu0 0.0
    %617 = vmatprep.subr.mxu0 0.0
    %618 = vmatpush2.msra.mxu0 0.0
    %619 = vmatprep.subr.mxu0 0.0
    %620 = vmatpush2.msra.mxu0 0.0
    %621 = vmatprep.mubr.f32.mxu0 0.0
    %622 = vmatmul.mubr.f32.gmra.mxu0 %v534
    %v623 = vpop.f32.mrf.mxu0
    %v624 = vadd.f32 0.0, %v623
    %v625 = vpop.f32.mrf.mxu0
    %626 = vmatprep.mubr.f32.mxu0 0.0
    %627 = vmatmul.mubr.f32.gmra.mxu0 %v537
    %v628 = vpop.f32.mrf.mxu0
    %v629 = vadd.f32 0.0, %v628
    %v630 = vpop.f32.mrf.mxu0
    %631 = vmatprep.mubr.f32.mxu0 0.0
    %632 = vmatmul.mubr.f32.gmra.mxu0 %v540
    %v633 = vpop.f32.mrf.mxu0
    %v634 = vadd.f32 0.0, %v633
    %v635 = vpop.f32.mrf.mxu0
    %636 = vmatprep.mubr.f32.mxu0 0.0
    %637 = vmatmul.mubr.f32.gmra.mxu0 %v543
    %v638 = vpop.f32.mrf.mxu0
    %v639 = vadd.f32 0.0, %v638
    %v640 = vpop.f32.mrf.mxu0
    %641 = vmatprep.mubr.f32.mxu0 0.0
    %642 = vmatmul.mubr.f32.gmra.mxu0 %v546
    %v643 = vpop.f32.mrf.mxu0
    %v644 = vadd.f32 0.0, %v643
    %v645 = vpop.f32.mrf.mxu0
    %646 = vmatprep.mubr.f32.mxu0 0.0
    %647 = vmatmul.mubr.f32.gmra.mxu0 %v549
    %v648 = vpop.f32.mrf.mxu0
    %v649 = vadd.f32 0.0, %v648
    %v650 = vpop.f32.mrf.mxu0
    %651 = vmatprep.mubr.f32.mxu0 0.0
    %652 = vmatmul.mubr.f32.gmra.mxu0 %v552
    %v653 = vpop.f32.mrf.mxu0
    %v654 = vadd.f32 0.0, %v653
    %v655 = vpop.f32.mrf.mxu0
    %656 = vmatprep.mubr.f32.mxu0 0.0
    %657 = vmatmul.mubr.f32.gmra.mxu0 %v555
    %v658 = vpop.f32.mrf.mxu0
    %v659 = vadd.f32 0.0, %v658
    %v660 = vpop.f32.mrf.mxu0
    %661 = vdwg.mxu0
    %v663 = vcombine.high %v525, %v525
    %v665 = vunpack.c.l.s4 1966171168
    %v666 = vunpack.c.0.s8 %v665
    %v667 = vlaneseq
    %v668 = vshrl.u32 %v667, 7
    %v669 = vsub.s32 %v666, %v668
    %v670 = vrot.slane %v525, %v669
    %v672 = vunpack.c.l.s4 1966171168
    %v673 = vunpack.c.0.s8 %v672
    %v674 = vlaneseq
    %v675 = vshrl.u32 %v674, 7
    %v676 = vsub.s32 %v673, %v675
    %v677 = vrot.slane %v663, %v676
    %v678 = vcombine.high %v670, %v670
    %v679 = vcombine.high %v677, %v677
    %v681 = vunpack.c.l.s4 1966171168
    %v682 = vunpack.c.0.s8 %v681
    %v683 = vlaneseq
    %v684 = vshrl.u32 %v683, 7
    %v685 = vsub.s32 %v682, %v684
    %v686 = vrot.slane %v670, %v685
    %v688 = vunpack.c.l.s4 1966171168
    %v689 = vunpack.c.0.s8 %v688
    %v690 = vlaneseq
    %v691 = vshrl.u32 %v690, 7
    %v692 = vsub.s32 %v689, %v691
    %v693 = vrot.slane %v677, %v692
    %v695 = vunpack.c.l.s4 1966171168
    %v696 = vunpack.c.0.s8 %v695
    %v697 = vlaneseq
    %v698 = vshrl.u32 %v697, 7
    %v699 = vsub.s32 %v696, %v698
    %v700 = vrot.slane %v678, %v699
    %v702 = vunpack.c.l.s4 1966171168
    %v703 = vunpack.c.0.s8 %v702
    %v704 = vlaneseq
    %v705 = vshrl.u32 %v704, 7
    %v706 = vsub.s32 %v703, %v705
    %v707 = vrot.slane %v679, %v706
    %v708 = vcombine.high %v686, %v686
    %v709 = vcombine.high %v693, %v693
    %v710 = vcombine.high %v700, %v700
    %v711 = vcombine.high %v707, %v707
    %v712 = vlaneseq
    %v713 = vshrl.u32 %v712, 7
    %v714 = vsub.s32 0, %v713
    %v715 = vrot.slane %v686, %v714
    %v716 = vlaneseq
    %v717 = vshrl.u32 %v716, 7
    %v718 = vsub.s32 0, %v717
    %v719 = vrot.slane %v700, %v718
    %v720 = vlaneseq
    %v721 = vshrl.u32 %v720, 7
    %v722 = vsub.s32 0, %v721
    %v723 = vrot.slane %v708, %v722
    %v724 = vlaneseq
    %v725 = vshrl.u32 %v724, 7
    %v726 = vsub.s32 0, %v725
    %v727 = vrot.slane %v710, %v726
    %v728 = vlaneseq
    %v729 = vshrl.u32 %v728, 7
    %v730 = vsub.s32 0, %v729
    %v731 = vrot.slane %v693, %v730
    %v732 = vlaneseq
    %v733 = vshrl.u32 %v732, 7
    %v734 = vsub.s32 0, %v733
    %v735 = vrot.slane %v707, %v734
    %v736 = vlaneseq
    %v737 = vshrl.u32 %v736, 7
    %v738 = vsub.s32 0, %v737
    %v739 = vrot.slane %v709, %v738
    %v740 = vlaneseq
    %v741 = vshrl.u32 %v740, 7
    %v742 = vsub.s32 0, %v741
    %v743 = vrot.slane %v711, %v742
    %v752 = vadd.f32 %v624, %v715
    %v753 = vadd.f32 %v629, %v719
    %v754 = vadd.f32 %v634, %v723
    %v755 = vadd.f32 %v639, %v727
    %v756 = vadd.f32 %v644, %v731
    %v757 = vadd.f32 %v649, %v735
    %v758 = vadd.f32 %v654, %v739
    %v759 = vadd.f32 %v659, %v743
    %v760 = vtanh.pop %v752
    %v761 = vtanh.pop %v753
    %v762 = vtanh.pop %v754
    %v763 = vtanh.pop %v755
    %v764 = vtanh.pop %v756
    %v765 = vtanh.pop %v757
    %v766 = vtanh.pop %v758
    %v767 = vtanh.pop %v759
    %v768 = vld [vmem:[%s8] sm:$0xff]
    %v769 = vld [vmem:[%s8 + $0x8] sm:$0xff]
    %v770 = vld [vmem:[%s8 + $0x10] sm:$0xff]
    %v771 = vld [vmem:[%s8 + $0x18] sm:$0xff]
    %v773 = vsel %vm268, %v760, 0
    %v776 = vsel %vm268, %v761, 0
    %v779 = vsel %vm268, %v762, 0
    %v782 = vsel %vm268, %v763, 0
    %v785 = vsel %vm268, %v764, 0
    %v788 = vsel %vm268, %v765, 0
    %v791 = vsel %vm268, %v766, 0
    %v794 = vsel %vm268, %v767, 0
    %796 = vmatprep.subr.mxu0 0.0
    %797 = vmatpush1.msra.mxu0 0.0
    %798 = vmatprep.subr.mxu0 0.0
    %799 = vmatpush1.msra.mxu0 0.0
    %800 = vmatprep.subr.mxu0 0.0
    %801 = vmatpush1.msra.mxu0 0.0
    %802 = vmatprep.subr.mxu0 0.0
    %803 = vmatpush1.msra.mxu0 0.0
    %804 = vmatprep.subr.mxu0 0.0
    %805 = vmatpush1.msra.mxu0 0.0
    %806 = vmatprep.subr.mxu0 0.0
    %807 = vmatpush1.msra.mxu0 0.0
    %808 = vmatprep.subr.mxu0 0.0
    %809 = vmatpush1.msra.mxu0 0.0
    %810 = vmatprep.subr.mxu0 0.0
    %811 = vmatpush1.msra.mxu0 0.0
    %812 = vmatprep.subr.mxu0 0.0
    %813 = vmatpush1.msra.mxu0 0.0
    %814 = vmatprep.subr.mxu0 0.0
    %815 = vmatpush1.msra.mxu0 0.0
    %816 = vmatprep.subr.mxu0 0.0
    %817 = vmatpush1.msra.mxu0 0.0
    %818 = vmatprep.subr.mxu0 0.0
    %819 = vmatpush1.msra.mxu0 0.0
    %820 = vmatprep.subr.mxu0 0.0
    %821 = vmatpush1.msra.mxu0 %v771
    %822 = vmatprep.subr.mxu0 0.0
    %823 = vmatpush1.msra.mxu0 %v770
    %824 = vmatprep.subr.mxu0 0.0
    %825 = vmatpush1.msra.mxu0 %v769
    %826 = vmatprep.subr.mxu0 0.0
    %827 = vmatpush1.msra.mxu0 %v768
    %828 = vmatprep.subr.mxu0 0.0
    %829 = vmatpush2.msra.mxu0 0.0
    %830 = vmatprep.subr.mxu0 0.0
    %831 = vmatpush2.msra.mxu0 0.0
    %832 = vmatprep.subr.mxu0 0.0
    %833 = vmatpush2.msra.mxu0 0.0
    %834 = vmatprep.subr.mxu0 0.0
    %835 = vmatpush2.msra.mxu0 0.0
    %836 = vmatprep.subr.mxu0 0.0
    %837 = vmatpush2.msra.mxu0 0.0
    %838 = vmatprep.subr.mxu0 0.0
    %839 = vmatpush2.msra.mxu0 0.0
    %840 = vmatprep.subr.mxu0 0.0
    %841 = vmatpush2.msra.mxu0 0.0
    %842 = vmatprep.subr.mxu0 0.0
    %843 = vmatpush2.msra.mxu0 0.0
    %844 = vmatprep.subr.mxu0 0.0
    %845 = vmatpush2.msra.mxu0 0.0
    %846 = vmatprep.subr.mxu0 0.0
    %847 = vmatpush2.msra.mxu0 0.0
    %848 = vmatprep.subr.mxu0 0.0
    %849 = vmatpush2.msra.mxu0 0.0
    %850 = vmatprep.subr.mxu0 0.0
    %851 = vmatpush2.msra.mxu0 0.0
    %852 = vmatprep.subr.mxu0 0.0
    %853 = vmatpush2.msra.mxu0 0.0
    %854 = vmatprep.subr.mxu0 0.0
    %855 = vmatpush2.msra.mxu0 0.0
    %856 = vmatprep.subr.mxu0 0.0
    %857 = vmatpush2.msra.mxu0 0.0
    %858 = vmatprep.subr.mxu0 0.0
    %859 = vmatpush2.msra.mxu0 0.0
    %860 = vmatprep.mubr.f32.mxu0 0.0
    %861 = vmatmul.mubr.f32.gmra.mxu0 %v773
    %v862 = vpop.f32.mrf.mxu0
    %v863 = vadd.f32 0.0, %v862
    %v864 = vpop.f32.mrf.mxu0
    %865 = vmatprep.mubr.f32.mxu0 0.0
    %866 = vmatmul.mubr.f32.gmra.mxu0 %v776
    %v867 = vpop.f32.mrf.mxu0
    %v868 = vadd.f32 0.0, %v867
    %v869 = vpop.f32.mrf.mxu0
    %870 = vmatprep.mubr.f32.mxu0 0.0
    %871 = vmatmul.mubr.f32.gmra.mxu0 %v779
    %v872 = vpop.f32.mrf.mxu0
    %v873 = vadd.f32 0.0, %v872
    %v874 = vpop.f32.mrf.mxu0
    %875 = vmatprep.mubr.f32.mxu0 0.0
    %876 = vmatmul.mubr.f32.gmra.mxu0 %v782
    %v877 = vpop.f32.mrf.mxu0
    %v878 = vadd.f32 0.0, %v877
    %v879 = vpop.f32.mrf.mxu0
    %880 = vmatprep.mubr.f32.mxu0 0.0
    %881 = vmatmul.mubr.f32.gmra.mxu0 %v785
    %v882 = vpop.f32.mrf.mxu0
    %v883 = vadd.f32 0.0, %v882
    %v884 = vpop.f32.mrf.mxu0
    %885 = vmatprep.mubr.f32.mxu0 0.0
    %886 = vmatmul.mubr.f32.gmra.mxu0 %v788
    %v887 = vpop.f32.mrf.mxu0
    %v888 = vadd.f32 0.0, %v887
    %v889 = vpop.f32.mrf.mxu0
    %890 = vmatprep.mubr.f32.mxu0 0.0
    %891 = vmatmul.mubr.f32.gmra.mxu0 %v791
    %v892 = vpop.f32.mrf.mxu0
    %v893 = vadd.f32 0.0, %v892
    %v894 = vpop.f32.mrf.mxu0
    %895 = vmatprep.mubr.f32.mxu0 0.0
    %896 = vmatmul.mubr.f32.gmra.mxu0 %v794
    %v897 = vpop.f32.mrf.mxu0
    %v898 = vadd.f32 0.0, %v897
    %v899 = vpop.f32.mrf.mxu0
    %900 = vdwg.mxu0
    %909 = vset.pattern.permute.xlu0 0
    %910 = vperm.xlu0 %909, %v863
    %v911 = vpop.permute.xlu0 %910
    %912 = vset.pattern.permute.xlu0 0
    %913 = vperm.xlu0 %912, %v868
    %v914 = vpop.permute.xlu0 %913
    %915 = vset.pattern.permute.xlu0 0
    %916 = vperm.xlu0 %915, %v873
    %v917 = vpop.permute.xlu0 %916
    %918 = vset.pattern.permute.xlu0 0
    %919 = vperm.xlu0 %918, %v878
    %v920 = vpop.permute.xlu0 %919
    %921 = vset.pattern.permute.xlu0 0
    %922 = vperm.xlu0 %921, %v883
    %v923 = vpop.permute.xlu0 %922
    %924 = vset.pattern.permute.xlu0 0
    %925 = vperm.xlu0 %924, %v888
    %v926 = vpop.permute.xlu0 %925
    %927 = vset.pattern.permute.xlu0 0
    %928 = vperm.xlu0 %927, %v893
    %v929 = vpop.permute.xlu0 %928
    %930 = vset.pattern.permute.xlu0 0
    %931 = vperm.xlu0 %930, %v898
    %v932 = vpop.permute.xlu0 %931
    %v933 = vlaneseq
    %v934 = vand.u32 %v933, 127
    %v935 = vlaneseq
    %v936 = vshrl.u32 %v935, 7
    %v937 = vsub.s32 %v934, %v936
    %v938 = vrot.slane %v911, %v937
    %v939 = vlaneseq
    %v940 = vshrl.u32 %v939, 7
    %v941 = vsub.s32 %v934, %v940
    %v942 = vrot.slane %v914, %v941
    %v943 = vlaneseq
    %v944 = vshrl.u32 %v943, 7
    %v945 = vsub.s32 %v934, %v944
    %v946 = vrot.slane %v917, %v945
    %v947 = vlaneseq
    %v948 = vshrl.u32 %v947, 7
    %v949 = vsub.s32 %v934, %v948
    %v950 = vrot.slane %v920, %v949
    %v951 = vlaneseq
    %v952 = vshrl.u32 %v951, 7
    %v953 = vsub.s32 %v934, %v952
    %v954 = vrot.slane %v923, %v953
    %v955 = vlaneseq
    %v956 = vshrl.u32 %v955, 7
    %v957 = vsub.s32 %v934, %v956
    %v958 = vrot.slane %v926, %v957
    %v959 = vlaneseq
    %v960 = vshrl.u32 %v959, 7
    %v961 = vsub.s32 %v934, %v960
    %v962 = vrot.slane %v929, %v961
    %v963 = vlaneseq
    %v964 = vshrl.u32 %v963, 7
    %v965 = vsub.s32 %v934, %v964
    %v966 = vrot.slane %v932, %v965
    %vm967 = vcmask 1041409
    %v968 = vsel %vm967, %v942, %v938
    %vm969 = vcmask 1042434
    %v970 = vsel %vm969, %v946, %v968
    %vm971 = vcmask 1043459
    %v972 = vsel %vm971, %v950, %v970
    %vm973 = vcmask 1044484
    %v974 = vsel %vm973, %v954, %v972
    %vm975 = vcmask 1045509
    %v976 = vsel %vm975, %v958, %v974
    %vm977 = vcmask 1046534
    %v978 = vsel %vm977, %v962, %v976
    %vm979 = vcmask 1047559
    %v980 = vsel %vm979, %v966, %v978
    %vm982 = vcmask 64512
    %v983 = vsel %vm982, %v980, -inf
    %984 = vmax.xlane.f32.xlu0 %v983
    %v985 = vpop.xlane.xlu0 %984
    %v987 = vlaneseq
    %v988 = vshrl.u32 %v987, 7
    %v989 = vsub.s32 0, %v988
    %v990 = vrot.slane %v985, %v989
    %v991 = vlaneseq
    %v992 = vshrl.u32 %v991, 7
    %v993 = vsub.s32 1, %v992
    %v994 = vrot.slane %v985, %v993
    %v995 = vlaneseq
    %v996 = vshrl.u32 %v995, 7
    %v997 = vsub.s32 2, %v996
    %v998 = vrot.slane %v985, %v997
    %v999 = vlaneseq
    %v1000 = vshrl.u32 %v999, 7
    %v1001 = vsub.s32 3, %v1000
    %v1002 = vrot.slane %v985, %v1001
    %v1003 = vlaneseq
    %v1004 = vshrl.u32 %v1003, 7
    %v1005 = vsub.s32 4, %v1004
    %v1006 = vrot.slane %v985, %v1005
    %v1007 = vlaneseq
    %v1008 = vshrl.u32 %v1007, 7
    %v1009 = vsub.s32 5, %v1008
    %v1010 = vrot.slane %v985, %v1009
    %v1011 = vlaneseq
    %v1012 = vshrl.u32 %v1011, 7
    %v1013 = vsub.s32 6, %v1012
    %v1014 = vrot.slane %v985, %v1013
    %v1015 = vlaneseq
    %v1016 = vshrl.u32 %v1015, 7
    %v1017 = vsub.s32 7, %v1016
    %v1018 = vrot.slane %v985, %v1017
    %v1027 = vsub.f32 %v863, %v990
    %v1028 = vsub.f32 %v868, %v994
    %v1029 = vsub.f32 %v873, %v998
    %v1030 = vsub.f32 %v878, %v1002
    %v1031 = vsub.f32 %v883, %v1006
    %v1032 = vsub.f32 %v888, %v1010
    %v1033 = vsub.f32 %v893, %v1014
    %v1034 = vsub.f32 %v898, %v1018
    %v1035 = vmul.f32 %v1027, 1.442695
    %v1036 = vpow.pop %v1035
    %v1037 = vmul.f32 %v1028, 1.442695
    %v1038 = vpow.pop %v1037
    %v1039 = vmul.f32 %v1029, 1.442695
    %v1040 = vpow.pop %v1039
    %v1041 = vmul.f32 %v1030, 1.442695
    %v1042 = vpow.pop %v1041
    %v1043 = vmul.f32 %v1031, 1.442695
    %v1044 = vpow.pop %v1043
    %v1045 = vmul.f32 %v1032, 1.442695
    %v1046 = vpow.pop %v1045
    %v1047 = vmul.f32 %v1033, 1.442695
    %v1048 = vpow.pop %v1047
    %v1049 = vmul.f32 %v1034, 1.442695
    %v1050 = vpow.pop %v1049
    %1059 = vset.pattern.permute.xlu0 0
    %1060 = vperm.xlu0 %1059, %v1036
    %v1061 = vpop.permute.xlu0 %1060
    %1062 = vset.pattern.permute.xlu0 0
    %1063 = vperm.xlu0 %1062, %v1038
    %v1064 = vpop.permute.xlu0 %1063
    %1065 = vset.pattern.permute.xlu0 0
    %1066 = vperm.xlu0 %1065, %v1040
    %v1067 = vpop.permute.xlu0 %1066
    %1068 = vset.pattern.permute.xlu0 0
    %1069 = vperm.xlu0 %1068, %v1042
    %v1070 = vpop.permute.xlu0 %1069
    %1071 = vset.pattern.permute.xlu0 0
    %1072 = vperm.xlu0 %1071, %v1044
    %v1073 = vpop.permute.xlu0 %1072
    %1074 = vset.pattern.permute.xlu0 0
    %1075 = vperm.xlu0 %1074, %v1046
    %v1076 = vpop.permute.xlu0 %1075
    %1077 = vset.pattern.permute.xlu0 0
    %1078 = vperm.xlu0 %1077, %v1048
    %v1079 = vpop.permute.xlu0 %1078
    %1080 = vset.pattern.permute.xlu0 0
    %1081 = vperm.xlu0 %1080, %v1050
    %v1082 = vpop.permute.xlu0 %1081
    %v1083 = vlaneseq
    %v1084 = vshrl.u32 %v1083, 7
    %v1085 = vsub.s32 %v934, %v1084
    %v1086 = vrot.slane %v1061, %v1085
    %v1087 = vlaneseq
    %v1088 = vshrl.u32 %v1087, 7
    %v1089 = vsub.s32 %v934, %v1088
    %v1090 = vrot.slane %v1064, %v1089
    %v1091 = vlaneseq
    %v1092 = vshrl.u32 %v1091, 7
    %v1093 = vsub.s32 %v934, %v1092
    %v1094 = vrot.slane %v1067, %v1093
    %v1095 = vlaneseq
    %v1096 = vshrl.u32 %v1095, 7
    %v1097 = vsub.s32 %v934, %v1096
    %v1098 = vrot.slane %v1070, %v1097
    %v1099 = vlaneseq
    %v1100 = vshrl.u32 %v1099, 7
    %v1101 = vsub.s32 %v934, %v1100
    %v1102 = vrot.slane %v1073, %v1101
    %v1103 = vlaneseq
    %v1104 = vshrl.u32 %v1103, 7
    %v1105 = vsub.s32 %v934, %v1104
    %v1106 = vrot.slane %v1076, %v1105
    %v1107 = vlaneseq
    %v1108 = vshrl.u32 %v1107, 7
    %v1109 = vsub.s32 %v934, %v1108
    %v1110 = vrot.slane %v1079, %v1109
    %v1111 = vlaneseq
    %v1112 = vshrl.u32 %v1111, 7
    %v1113 = vsub.s32 %v934, %v1112
    %v1114 = vrot.slane %v1082, %v1113
    %v1115 = vsel %vm967, %v1090, %v1086
    %v1116 = vsel %vm969, %v1094, %v1115
    %v1117 = vsel %vm971, %v1098, %v1116
    %v1118 = vsel %vm973, %v1102, %v1117
    %v1119 = vsel %vm975, %v1106, %v1118
    %v1120 = vsel %vm977, %v1110, %v1119
    %v1121 = vsel %vm979, %v1114, %v1120
    %v1123 = vsel %vm982, %v1121, 0.0
    %1124 = vadd.xlane.f32.xlu0 %v1123
    %v1125 = vpop.xlane.xlu0 %1124
    %v1127 = vlaneseq
    %v1128 = vshrl.u32 %v1127, 7
    %v1129 = vsub.s32 0, %v1128
    %v1130 = vrot.slane %v1125, %v1129
    %v1131 = vlaneseq
    %v1132 = vshrl.u32 %v1131, 7
    %v1133 = vsub.s32 1, %v1132
    %v1134 = vrot.slane %v1125, %v1133
    %v1135 = vlaneseq
    %v1136 = vshrl.u32 %v1135, 7
    %v1137 = vsub.s32 2, %v1136
    %v1138 = vrot.slane %v1125, %v1137
    %v1139 = vlaneseq
    %v1140 = vshrl.u32 %v1139, 7
    %v1141 = vsub.s32 3, %v1140
    %v1142 = vrot.slane %v1125, %v1141
    %v1143 = vlaneseq
    %v1144 = vshrl.u32 %v1143, 7
    %v1145 = vsub.s32 4, %v1144
    %v1146 = vrot.slane %v1125, %v1145
    %v1147 = vlaneseq
    %v1148 = vshrl.u32 %v1147, 7
    %v1149 = vsub.s32 5, %v1148
    %v1150 = vrot.slane %v1125, %v1149
    %v1151 = vlaneseq
    %v1152 = vshrl.u32 %v1151, 7
    %v1153 = vsub.s32 6, %v1152
    %v1154 = vrot.slane %v1125, %v1153
    %v1155 = vlaneseq
    %v1156 = vshrl.u32 %v1155, 7
    %v1157 = vsub.s32 7, %v1156
    %v1158 = vrot.slane %v1125, %v1157
    %v1167 = vrcp.pop %v1130
    %v1168 = vmul.f32 %v1036, %v1167
    %v1169 = vrcp.pop %v1134
    %v1170 = vmul.f32 %v1038, %v1169
    %v1171 = vrcp.pop %v1138
    %v1172 = vmul.f32 %v1040, %v1171
    %v1173 = vrcp.pop %v1142
    %v1174 = vmul.f32 %v1042, %v1173
    %v1175 = vrcp.pop %v1146
    %v1176 = vmul.f32 %v1044, %v1175
    %v1177 = vrcp.pop %v1150
    %v1178 = vmul.f32 %v1046, %v1177
    %v1179 = vrcp.pop %v1154
    %v1180 = vmul.f32 %v1048, %v1179
    %v1181 = vrcp.pop %v1158
    %v1182 = vmul.f32 %v1050, %v1181
    %s1183 = scalar_lea.vmem %s2, 64
    %v1184 = vld [vmem:[%s1183] sm:$0xff]
    %v1185 = vld [vmem:[%s1183 + $0x8] sm:$0xff]
    %v1186 = vld [vmem:[%s1183 + $0x10] sm:$0xff]
    %v1187 = vld [vmem:[%s1183 + $0x18] sm:$0xff]
    %v1188 = vld [vmem:[%s1183 + $0x20] sm:$0xff]
    %v1189 = vld [vmem:[%s1183 + $0x28] sm:$0xff]
    %v1190 = vld [vmem:[%s1183 + $0x30] sm:$0xff]
    %v1191 = vld [vmem:[%s1183 + $0x38] sm:$0xff]
    %1193 = vset.pattern.permute.xlu0 0
    %1194 = vperm.xlu0 %1193, %v1168
    %v1195 = vpop.permute.xlu0 %1194
    %1198 = vset.pattern.permute.xlu0 0
    %1199 = vperm.xlu0 %1198, %v1170
    %v1200 = vpop.permute.xlu0 %1199
    %1203 = vset.pattern.permute.xlu0 0
    %1204 = vperm.xlu0 %1203, %v1172
    %v1205 = vpop.permute.xlu0 %1204
    %1208 = vset.pattern.permute.xlu0 0
    %1209 = vperm.xlu0 %1208, %v1174
    %v1210 = vpop.permute.xlu0 %1209
    %1213 = vset.pattern.permute.xlu0 0
    %1214 = vperm.xlu0 %1213, %v1176
    %v1215 = vpop.permute.xlu0 %1214
    %1218 = vset.pattern.permute.xlu0 0
    %1219 = vperm.xlu0 %1218, %v1178
    %v1220 = vpop.permute.xlu0 %1219
    %1223 = vset.pattern.permute.xlu0 0
    %1224 = vperm.xlu0 %1223, %v1180
    %v1225 = vpop.permute.xlu0 %1224
    %1228 = vset.pattern.permute.xlu0 0
    %1229 = vperm.xlu0 %1228, %v1182
    %v1230 = vpop.permute.xlu0 %1229
    %v1232 = vmul.f32 %v1195, %v1184
    %v1233 = vmul.f32 %v1200, %v1185
    %v1234 = vmul.f32 %v1205, %v1186
    %v1235 = vmul.f32 %v1210, %v1187
    %v1236 = vmul.f32 %v1215, %v1188
    %v1237 = vmul.f32 %v1220, %v1189
    %v1238 = vmul.f32 %v1225, %v1190
    %v1239 = vmul.f32 %v1230, %v1191
    %v1240 = vsel %vm268, %v1232, 0.0
    %v1241 = vrot.slane %v1240, 4
    %v1242 = vadd.f32 %v1240, %v1241
    %v1243 = vrot.slane %v1242, 2
    %v1244 = vadd.f32 %v1242, %v1243
    %v1245 = vrot.slane %v1244, 1
    %v1246 = vadd.f32 %v1244, %v1245
    %v1247 = vsel %vm268, %v1233, 0.0
    %v1248 = vrot.slane %v1247, 4
    %v1249 = vadd.f32 %v1247, %v1248
    %v1250 = vrot.slane %v1249, 2
    %v1251 = vadd.f32 %v1249, %v1250
    %v1252 = vrot.slane %v1251, 1
    %v1253 = vadd.f32 %v1251, %v1252
    %v1254 = vsel %vm268, %v1234, 0.0
    %v1255 = vrot.slane %v1254, 4
    %v1256 = vadd.f32 %v1254, %v1255
    %v1257 = vrot.slane %v1256, 2
    %v1258 = vadd.f32 %v1256, %v1257
    %v1259 = vrot.slane %v1258, 1
    %v1260 = vadd.f32 %v1258, %v1259
    %v1261 = vsel %vm268, %v1235, 0.0
    %v1262 = vrot.slane %v1261, 4
    %v1263 = vadd.f32 %v1261, %v1262
    %v1264 = vrot.slane %v1263, 2
    %v1265 = vadd.f32 %v1263, %v1264
    %v1266 = vrot.slane %v1265, 1
    %v1267 = vadd.f32 %v1265, %v1266
    %v1268 = vsel %vm268, %v1236, 0.0
    %v1269 = vrot.slane %v1268, 4
    %v1270 = vadd.f32 %v1268, %v1269
    %v1271 = vrot.slane %v1270, 2
    %v1272 = vadd.f32 %v1270, %v1271
    %v1273 = vrot.slane %v1272, 1
    %v1274 = vadd.f32 %v1272, %v1273
    %v1275 = vsel %vm268, %v1237, 0.0
    %v1276 = vrot.slane %v1275, 4
    %v1277 = vadd.f32 %v1275, %v1276
    %v1278 = vrot.slane %v1277, 2
    %v1279 = vadd.f32 %v1277, %v1278
    %v1280 = vrot.slane %v1279, 1
    %v1281 = vadd.f32 %v1279, %v1280
    %v1282 = vsel %vm268, %v1238, 0.0
    %v1283 = vrot.slane %v1282, 4
    %v1284 = vadd.f32 %v1282, %v1283
    %v1285 = vrot.slane %v1284, 2
    %v1286 = vadd.f32 %v1284, %v1285
    %v1287 = vrot.slane %v1286, 1
    %v1288 = vadd.f32 %v1286, %v1287
    %v1289 = vsel %vm268, %v1239, 0.0
    %v1290 = vrot.slane %v1289, 4
    %v1291 = vadd.f32 %v1289, %v1290
    %v1292 = vrot.slane %v1291, 2
    %v1293 = vadd.f32 %v1291, %v1292
    %v1294 = vrot.slane %v1293, 1
    %v1295 = vadd.f32 %v1293, %v1294
    %v1296 = vld [vmem:[#allocation5] sm:$0xff]
    %v1297 = vld [vmem:[#allocation5 + $0x8] sm:$0xff]
    %v1298 = vld [vmem:[#allocation5 + $0x10] sm:$0xff]
    %v1299 = vld [vmem:[#allocation5 + $0x18] sm:$0xff]
    %s1300 = scalar_lea.vmem [#allocation5], 32
    %v1301 = vld [vmem:[%s1300] sm:$0xff]
    %v1302 = vld [vmem:[%s1300 + $0x8] sm:$0xff]
    %v1303 = vld [vmem:[%s1300 + $0x10] sm:$0xff]
    %v1304 = vld [vmem:[%s1300 + $0x18] sm:$0xff]
    %v1313 = vsel %vm967, %v1253, %v1246
    %v1314 = vsel %vm969, %v1260, %v1313
    %v1315 = vsel %vm971, %v1267, %v1314
    %v1316 = vsel %vm973, %v1274, %v1315
    %v1317 = vsel %vm975, %v1281, %v1316
    %v1318 = vsel %vm977, %v1288, %v1317
    %v1319 = vsel %vm979, %v1295, %v1318
    %v1320 = vsel %vm268, %v1319, 0
    %1322 = vmatprep.subr.mxu0 0.0
    %1323 = vmatpush1.msra.mxu0 0.0
    %1324 = vmatprep.subr.mxu0 0.0
    %1325 = vmatpush1.msra.mxu0 0.0
    %1326 = vmatprep.subr.mxu0 0.0
    %1327 = vmatpush1.msra.mxu0 0.0
    %1328 = vmatprep.subr.mxu0 0.0
    %1329 = vmatpush1.msra.mxu0 0.0
    %1330 = vmatprep.subr.mxu0 0.0
    %1331 = vmatpush1.msra.mxu0 0.0
    %1332 = vmatprep.subr.mxu0 0.0
    %1333 = vmatpush1.msra.mxu0 0.0
    %1334 = vmatprep.subr.mxu0 0.0
    %1335 = vmatpush1.msra.mxu0 0.0
    %1336 = vmatprep.subr.mxu0 0.0
    %1337 = vmatpush1.msra.mxu0 0.0
    %1338 = vmatprep.subr.mxu0 0.0
    %1339 = vmatpush1.msra.mxu0 0.0
    %1340 = vmatprep.subr.mxu0 0.0
    %1341 = vmatpush1.msra.mxu0 0.0
    %1342 = vmatprep.subr.mxu0 0.0
    %1343 = vmatpush1.msra.mxu0 0.0
    %1344 = vmatprep.subr.mxu0 0.0
    %1345 = vmatpush1.msra.mxu0 0.0
    %1346 = vmatprep.subr.mxu0 0.0
    %1347 = vmatpush1.msra.mxu0 %v1304
    %1348 = vmatprep.subr.mxu0 0.0
    %1349 = vmatpush1.msra.mxu0 %v1303
    %1350 = vmatprep.subr.mxu0 0.0
    %1351 = vmatpush1.msra.mxu0 %v1302
    %1352 = vmatprep.subr.mxu0 0.0
    %1353 = vmatpush1.msra.mxu0 %v1301
    %1354 = vmatprep.subr.mxu0 0.0
    %1355 = vmatpush2.msra.mxu0 0.0
    %1356 = vmatprep.subr.mxu0 0.0
    %1357 = vmatpush2.msra.mxu0 0.0
    %1358 = vmatprep.subr.mxu0 0.0
    %1359 = vmatpush2.msra.mxu0 0.0
    %1360 = vmatprep.subr.mxu0 0.0
    %1361 = vmatpush2.msra.mxu0 0.0
    %1362 = vmatprep.subr.mxu0 0.0
    %1363 = vmatpush2.msra.mxu0 0.0
    %1364 = vmatprep.subr.mxu0 0.0
    %1365 = vmatpush2.msra.mxu0 0.0
    %1366 = vmatprep.subr.mxu0 0.0
    %1367 = vmatpush2.msra.mxu0 0.0
    %1368 = vmatprep.subr.mxu0 0.0
    %1369 = vmatpush2.msra.mxu0 0.0
    %1370 = vmatprep.subr.mxu0 0.0
    %1371 = vmatpush2.msra.mxu0 0.0
    %1372 = vmatprep.subr.mxu0 0.0
    %1373 = vmatpush2.msra.mxu0 0.0
    %1374 = vmatprep.subr.mxu0 0.0
    %1375 = vmatpush2.msra.mxu0 0.0
    %1376 = vmatprep.subr.mxu0 0.0
    %1377 = vmatpush2.msra.mxu0 0.0
    %1378 = vmatprep.subr.mxu0 0.0
    %1379 = vmatpush2.msra.mxu0 0.0
    %1380 = vmatprep.subr.mxu0 0.0
    %1381 = vmatpush2.msra.mxu0 0.0
    %1382 = vmatprep.subr.mxu0 0.0
    %1383 = vmatpush2.msra.mxu0 0.0
    %1384 = vmatprep.subr.mxu0 0.0
    %1385 = vmatpush2.msra.mxu0 0.0
    %1386 = vmatprep.mubr.f32.mxu0 0.0
    %1387 = vmatmul.mubr.f32.gmra.mxu0 %v1320
    %v1388 = vpop.f32.mrf.mxu0
    %v1389 = vadd.f32 0.0, %v1388
    %v1390 = vpop.f32.mrf.mxu0
    %1391 = vdwg.mxu0
    %1392 = vmatprep.subr.mxu0 0.0
    %1393 = vmatpush1.msra.mxu0 0.0
    %1394 = vmatprep.subr.mxu0 0.0
    %1395 = vmatpush1.msra.mxu0 0.0
    %1396 = vmatprep.subr.mxu0 0.0
    %1397 = vmatpush1.msra.mxu0 0.0
    %1398 = vmatprep.subr.mxu0 0.0
    %1399 = vmatpush1.msra.mxu0 0.0
    %1400 = vmatprep.subr.mxu0 0.0
    %1401 = vmatpush1.msra.mxu0 0.0
    %1402 = vmatprep.subr.mxu0 0.0
    %1403 = vmatpush1.msra.mxu0 0.0
    %1404 = vmatprep.subr.mxu0 0.0
    %1405 = vmatpush1.msra.mxu0 0.0
    %1406 = vmatprep.subr.mxu0 0.0
    %1407 = vmatpush1.msra.mxu0 0.0
    %1408 = vmatprep.subr.mxu0 0.0
    %1409 = vmatpush1.msra.mxu0 0.0
    %1410 = vmatprep.subr.mxu0 0.0
    %1411 = vmatpush1.msra.mxu0 0.0
    %1412 = vmatprep.subr.mxu0 0.0
    %1413 = vmatpush1.msra.mxu0 0.0
    %1414 = vmatprep.subr.mxu0 0.0
    %1415 = vmatpush1.msra.mxu0 0.0
    %1416 = vmatprep.subr.mxu0 0.0
    %1417 = vmatpush1.msra.mxu0 %v1299
    %1418 = vmatprep.subr.mxu0 0.0
    %1419 = vmatpush1.msra.mxu0 %v1298
    %1420 = vmatprep.subr.mxu0 0.0
    %1421 = vmatpush1.msra.mxu0 %v1297
    %1422 = vmatprep.subr.mxu0 0.0
    %1423 = vmatpush1.msra.mxu0 %v1296
    %1424 = vmatprep.subr.mxu0 0.0
    %1425 = vmatpush2.msra.mxu0 0.0
    %1426 = vmatprep.subr.mxu0 0.0
    %1427 = vmatpush2.msra.mxu0 0.0
    %1428 = vmatprep.subr.mxu0 0.0
    %1429 = vmatpush2.msra.mxu0 0.0
    %1430 = vmatprep.subr.mxu0 0.0
    %1431 = vmatpush2.msra.mxu0 0.0
    %1432 = vmatprep.subr.mxu0 0.0
    %1433 = vmatpush2.msra.mxu0 0.0
    %1434 = vmatprep.subr.mxu0 0.0
    %1435 = vmatpush2.msra.mxu0 0.0
    %1436 = vmatprep.subr.mxu0 0.0
    %1437 = vmatpush2.msra.mxu0 0.0
    %1438 = vmatprep.subr.mxu0 0.0
    %1439 = vmatpush2.msra.mxu0 0.0
    %1440 = vmatprep.subr.mxu0 0.0
    %1441 = vmatpush2.msra.mxu0 0.0
    %1442 = vmatprep.subr.mxu0 0.0
    %1443 = vmatpush2.msra.mxu0 0.0
    %1444 = vmatprep.subr.mxu0 0.0
    %1445 = vmatpush2.msra.mxu0 0.0
    %1446 = vmatprep.subr.mxu0 0.0
    %1447 = vmatpush2.msra.mxu0 0.0
    %1448 = vmatprep.subr.mxu0 0.0
    %1449 = vmatpush2.msra.mxu0 0.0
    %1450 = vmatprep.subr.mxu0 0.0
    %1451 = vmatpush2.msra.mxu0 0.0
    %1452 = vmatprep.subr.mxu0 0.0
    %1453 = vmatpush2.msra.mxu0 0.0
    %1454 = vmatprep.subr.mxu0 0.0
    %1455 = vmatpush2.msra.mxu0 0.0
    %1456 = vmatprep.mubr.f32.mxu0 0.0
    %1457 = vmatmul.mubr.f32.gmra.mxu0 %v456
    %v1458 = vpop.f32.mrf.mxu0
    %v1459 = vadd.f32 %v1389, %v1458
    %v1460 = vpop.f32.mrf.mxu0
    %1461 = vdwg.mxu0
    %v1462 = vld [vmem:[%s9] sm:$0x1]
    %v1464 = vlaneseq
    %v1465 = vshrl.u32 %v1464, 7
    %v1466 = vsub.s32 0, %v1465
    %v1467 = vrot.slane %v1462, %v1466
    %v1469 = vadd.f32 %v1459, %v1467
    %1470 = vst [vmem:[#allocation7] sm:$0xff] %v1469
    %v1471 = vadd.s32 %v934, 4294967264
    %v1472 = vlaneseq
    %v1473 = vshrl.u32 %v1472, 7
    %v1474 = vsub.s32 %v1471, %v1473
    %v1475 = vrot.slane %v1195, %v1474
    %v1476 = vlaneseq
    %v1477 = vshrl.u32 %v1476, 7
    %v1478 = vsub.s32 %v1471, %v1477
    %v1479 = vrot.slane %v1200, %v1478
    %v1480 = vlaneseq
    %v1481 = vshrl.u32 %v1480, 7
    %v1482 = vsub.s32 %v1471, %v1481
    %v1483 = vrot.slane %v1205, %v1482
    %v1484 = vlaneseq
    %v1485 = vshrl.u32 %v1484, 7
    %v1486 = vsub.s32 %v1471, %v1485
    %v1487 = vrot.slane %v1210, %v1486
    %v1488 = vlaneseq
    %v1489 = vshrl.u32 %v1488, 7
    %v1490 = vsub.s32 %v1471, %v1489
    %v1491 = vrot.slane %v1215, %v1490
    %v1492 = vlaneseq
    %v1493 = vshrl.u32 %v1492, 7
    %v1494 = vsub.s32 %v1471, %v1493
    %v1495 = vrot.slane %v1220, %v1494
    %v1496 = vlaneseq
    %v1497 = vshrl.u32 %v1496, 7
    %v1498 = vsub.s32 %v1471, %v1497
    %v1499 = vrot.slane %v1225, %v1498
    %v1500 = vlaneseq
    %v1501 = vshrl.u32 %v1500, 7
    %v1502 = vsub.s32 %v1471, %v1501
    %v1503 = vrot.slane %v1230, %v1502
    %v1504 = vsel %vm967, %v1479, %v1475
    %v1505 = vsel %vm969, %v1483, %v1504
    %v1506 = vsel %vm971, %v1487, %v1505
    %v1507 = vsel %vm973, %v1491, %v1506
    %v1508 = vsel %vm975, %v1495, %v1507
    %v1509 = vsel %vm977, %v1499, %v1508
    %v1510 = vsel %vm979, %v1503, %v1509
    %v1512 = vsel %vm268, %v434, %v1510
    %vm1513 = vcmask 326656
    %v1514 = vsel %vm1513, %v1512, 0.0
    %s1515 = scalar_lea.vmem [#allocation7], 8
    %1516 = vst [vmem:[%s1515] sm:$0xff] %v1514
    // Predicated region
    $region50: #{tpu_custom_call.1} parent=1 // pred_check
      _
    $region51: #{tpu_custom_call.1} parent=1 // pred_check_branch
      %1518 = sbr.rel (0) target = $region53
    $region52: #{tpu_custom_call.1} parent=1 // pred_region
      %s1520 = ssub.s32 256, 256
      %1521 = vsyncadd [#allocation4], %s1520
      %s1522 = sshll.u32 [#allocation7], 4
      %s1523 = int_to_ptr.vmem [resolvable:$true] %s1522
      %1528 = dma.vmem_to_hbm [thread:$0]  %s1523, 256, %s10, [#allocation4], 128, 128, 8
    $region53: #{tpu_custom_call.1} parent=1 // pred_fallthru
      _
    // Predicated region
    $region54: #{tpu_custom_call.1} parent=1 // pred_check
      _
    $region55: #{tpu_custom_call.1} parent=1 // pred_check_branch
      %1530 = sbr.rel (0) target = $region57
    $region56: #{tpu_custom_call.1} parent=1 // pred_region
      %1531 = dma.done [#allocation4], 256
    $region57: #{tpu_custom_call.1} parent=1 // pred_fallthru
      _
    %1532 = vsyncpa [#allocation3], 1
    %1533 = vsyncpa [#allocation6], 1
    %1534 = vsyncpa [#allocation4], 1

</llo_original>
